<compile_context>
chip_gen: v6e
topology: v6e:2x2x1
jax: 0.10.0
libtpu: 0.0.40
codegen_flags: <defaults>
</compile_context>

<pallas_src>
import functools

import jax
import jax.numpy as jnp
from jax.experimental import pallas as pl
from jax.experimental.pallas import tpu as pltpu


def _round_up(x, m):
    return ((x + m - 1) // m) * m


def _tcn_kernel(num_levels, ksize, dilation_base, t_pad, has_ds, w_offs, b_idx,
                xm_ref, wpack_ref, bpack_ref, out_ref):
    """Whole TCN forward for one batch block on a flat (TB*t_pad, CP) tile."""
    f32 = jnp.float32
    bf16 = jnp.bfloat16
    n_rows = xm_ref.shape[0]

    def mm(a, b):
        # bf16 MXU matmul with f32 accumulation.
        return jnp.dot(a.astype(bf16), b, preferred_element_type=f32)

    def w(name):
        off, rows = w_offs[name]
        return wpack_ref[off:off + rows, :]

    def b(name):
        i = b_idx[name]
        return bpack_ref[i:i + 1, :]

    # Per-shift row masks (zero rows whose causal source would cross a sample
    # boundary).  Built once per grid step and hoisted out of the level loop
    # (JAX does not CSE broadcast/iota).
    shifts = sorted({(ksize - 1 - j) * dilation_base ** lvl
                     for lvl in range(num_levels) for j in range(ksize)} - {0})
    t_in_sample = jax.lax.broadcasted_iota(jnp.int32, (n_rows, 1), 0) % t_pad
    masks = {s: (t_in_sample >= s).astype(f32) for s in shifts}

    def shift_rows(u, s):
        # out[t] = u[t - s] within each sample, zero for t < s.
        # pltpu.roll uses the XLU slot and the mask multiply the VPU slot,
        # both off the MXU critical path (replaces the old dense shift matmul).
        if s == 0:
            return u
        return masks[s] * pltpu.roll(u, shift=s, axis=0)

    def causal_conv(u, w_stacked, bias, dil):
        # Conv1d(stride=1, dilation=dil, padding=(k-1)*dil) + Chomp1d(padding)
        # == causal dilated conv.  All k taps are fused into one MXU matmul
        # against the host-prestacked (k*CP, CP) weight.
        srcs = [shift_rows(u, (ksize - 1 - j) * dil) for j in range(ksize)]
        stacked = srcs[0] if ksize == 1 else jnp.concatenate(srcs, axis=-1)
        return mm(stacked, w_stacked) + bias

    # Fused create_inputs: [x || marks] @ W_in + b_in
    # (the x passthrough is an identity block inside W_in).
    h = mm(xm_ref[...], w("w_in")) + b("b_in")

    for lvl in range(num_levels):
        dil = dilation_base ** lvl
        # Dropout layers are inference-mode identities.
        a1 = jnp.maximum(causal_conv(h, w(f"w1_{lvl}"), b(f"b1_{lvl}"), dil), 0.0)
        a2 = jnp.maximum(causal_conv(a1, w(f"w2_{lvl}"), b(f"b2_{lvl}"), dil), 0.0)
        if has_ds[lvl]:
            res = mm(h, w(f"wds_{lvl}")) + b(f"bds_{lvl}")
        else:
            res = h
        h = jnp.maximum(a2 + res, 0.0)

    out_ref[...] = (mm(h, w("w_proj")) + b("b_proj")).astype(out_ref.dtype)


def _build_packs(params, *, c_in, c_out, d_inp, embedding_dim, dims,
                 kernel_size, cp, f_rows, has_ds):
    """Pack every weight into one bf16 (P, cp) array and every bias into one
    f32 (R, cp) array (zero-padded lane-dense blocks, static row offsets)."""
    f32 = jnp.float32
    num_levels = len(dims)

    w_offs = {}
    cursor = 0

    def reserve(name, rows):
        nonlocal cursor
        w_offs[name] = (cursor, rows)
        cursor += rows

    reserve("w_in", f_rows)
    for lvl in range(num_levels):
        reserve(f"w1_{lvl}", kernel_size * cp)
        reserve(f"w2_{lvl}", kernel_size * cp)
        if has_ds[lvl]:
            reserve(f"wds_{lvl}", cp)
    reserve("w_proj", cp)

    wpack = jnp.zeros((cursor, cp), f32)
    off = w_offs["w_in"][0]
    wpack = wpack.at[off:off + c_in, :c_in].set(jnp.eye(c_in, dtype=f32))
    wpack = wpack.at[off + c_in:off + c_in + d_inp,
                     c_in:c_in + embedding_dim].set(params["w_emb"])

    in_ch = c_in + embedding_dim
    for lvl, (out_ch, blk) in enumerate(zip(dims, params["blocks"])):
        off = w_offs[f"w1_{lvl}"][0]
        for j in range(kernel_size):
            wpack = wpack.at[off + j * cp:off + j * cp + in_ch,
                             :out_ch].set(blk["w1_taps"][j])
        off = w_offs[f"w2_{lvl}"][0]
        for j in range(kernel_size):
            wpack = wpack.at[off + j * cp:off + j * cp + out_ch,
                             :out_ch].set(blk["w2_taps"][j])
        if has_ds[lvl]:
            off = w_offs[f"wds_{lvl}"][0]
            wpack = wpack.at[off:off + in_ch, :out_ch].set(blk["wds"])
        in_ch = out_ch
    off = w_offs["w_proj"][0]
    wpack = wpack.at[off:off + dims[-1], :c_out].set(params["w_proj"])

    names = ["b_in"]
    for lvl in range(num_levels):
        names += [f"b1_{lvl}", f"b2_{lvl}"]
        if has_ds[lvl]:
            names.append(f"bds_{lvl}")
    names.append("b_proj")
    b_idx = {nm: i for i, nm in enumerate(names)}
    bpack = jnp.zeros((_round_up(len(names), 8), cp), f32)
    bpack = bpack.at[b_idx["b_in"],
                     c_in:c_in + embedding_dim].set(params["b_emb"][0])
    for lvl, (out_ch, blk) in enumerate(zip(dims, params["blocks"])):
        bpack = bpack.at[b_idx[f"b1_{lvl}"], :out_ch].set(blk["b1"][0])
        bpack = bpack.at[b_idx[f"b2_{lvl}"], :out_ch].set(blk["b2"][0])
        if has_ds[lvl]:
            bpack = bpack.at[b_idx[f"bds_{lvl}"], :out_ch].set(blk["bds"][0])
    bpack = bpack.at[b_idx["b_proj"], :c_out].set(params["b_proj"][0])

    return wpack.astype(jnp.bfloat16), bpack, w_offs, b_idx


def tcn_forward(x, x_mark, y_mark, params, *, c_in, c_out,
                num_hidden_dimensions, hist_len, pred_len, dilation_base=2,
                kernel_size=2, embedding_dim=10, d_inp=5, batch_block=None):
    assert hist_len >= pred_len
    B = x.shape[0]
    dims = list(num_hidden_dimensions)
    num_levels = len(dims)
    T = hist_len + pred_len
    t_pad = _round_up(T, 8)                 # sublane-aligned per-sample length
    if batch_block is None:
        # Prefer >= 2 parallel grid blocks (v7x has 2 TensorCores per chip).
        batch_block = B // 2 if (B % 2 == 0 and B >= 2) else B
    TB = batch_block
    assert B % TB == 0, "batch_block must divide the batch size"
    num_blocks = B // TB
    n_rows = TB * t_pad

    f32 = jnp.float32
    # Lane-dense channel pad: every channel dim padded to a multiple of 128.
    cp = _round_up(max([c_in + embedding_dim] + dims + [c_out]), 128)
    # bf16 sublane-pack aligned row count for the fused input-embedding weight.
    f_rows = _round_up(c_in + d_inp, 16)

    # ---- host-side input assembly (TCN.create_inputs + alignment padding) ----
    x_pad = jnp.concatenate(
        [x.astype(f32), jnp.zeros((B, t_pad - hist_len, c_in), f32)], axis=1)
    marks = jnp.concatenate(
        [x_mark.astype(f32), y_mark.astype(f32),
         jnp.zeros((B, t_pad - T, d_inp), f32)], axis=1)
    xm = jnp.concatenate(
        [x_pad, marks,
         jnp.zeros((B, t_pad, f_rows - (c_in + d_inp)), f32)], axis=-1)
    xm_flat = xm.reshape(B * t_pad, f_rows).astype(jnp.bfloat16)

    in_ch_list = [c_in + embedding_dim] + dims[:-1]
    has_ds = tuple(in_ch_list[i] != dims[i] for i in range(num_levels))

    wpack, bpack, w_offs, b_idx = _build_packs(
        params, c_in=c_in, c_out=c_out, d_inp=d_inp,
        embedding_dim=embedding_dim, dims=dims, kernel_size=kernel_size,
        cp=cp, f_rows=f_rows, has_ds=has_ds)

    kernel = functools.partial(_tcn_kernel, num_levels, kernel_size,
                               dilation_base, t_pad, has_ds, w_offs, b_idx)

    # Advisory cost estimate for XLA scheduling (post-shift-removal real work).
    n_tot = B * t_pad
    flops = 2 * n_tot * f_rows * cp
    for lvl in range(num_levels):
        flops += 2 * (2 * n_tot * (kernel_size * cp) * cp)
        if has_ds[lvl]:
            flops += 2 * n_tot * cp * cp
    flops += 2 * n_tot * cp * cp
    bytes_accessed = (xm_flat.size * 2 + n_tot * cp * 4
                      + num_blocks * (wpack.size * 2 + bpack.size * 4))

    out_flat = pl.pallas_call(
        kernel,
        out_shape=jax.ShapeDtypeStruct((num_blocks * n_rows, cp), f32),
        grid_spec=pltpu.PrefetchScalarGridSpec(
            num_scalar_prefetch=0,
            grid=(num_blocks,),
            in_specs=[
                pl.BlockSpec((n_rows, f_rows), lambda g: (g, 0)),
                pl.BlockSpec(wpack.shape, lambda g: (0, 0)),
                pl.BlockSpec(bpack.shape, lambda g: (0, 0)),
            ],
            out_specs=pl.BlockSpec((n_rows, cp), lambda g: (g, 0)),
        ),
        compiler_params=pltpu.CompilerParams(
            dimension_semantics=("parallel",),
            vmem_limit_bytes=32 * 1024 * 1024),
        cost_estimate=pl.CostEstimate(flops=int(flops), transcendentals=0,
                                      bytes_accessed=int(bytes_accessed)),
    )(xm_flat, wpack, bpack)

    # Keep the last pred_len real time steps (== x[:, -pred_len:, :] of the
    # length-T sequence) and the real output channels; host-side slicing only.
    out = out_flat.reshape(B, t_pad, cp)[:, hist_len:hist_len + pred_len, :c_out]
    return out


def init_params(key, *, c_in, c_out, num_hidden_dimensions, embedding_dim,
                d_inp, kernel_size=2):
    """Synthetic parameters in (in_features, out_features) layout.

    weight_norm only reparameterizes the conv weights; the forward uses the
    effective weight, so effective weights are generated directly.
    """
    dims = list(num_hidden_dimensions)
    keys = iter(jax.random.split(key, 8 + len(dims) * (2 * kernel_size + 4)))
    s = 0.1

    def w(shape):
        return jax.random.normal(next(keys), shape, jnp.float32) * s

    params = {"w_emb": w((d_inp, embedding_dim)),
              "b_emb": w((1, embedding_dim))}
    blocks = []
    in_ch = c_in + embedding_dim
    for out_ch in dims:
        blk = {"w1_taps": [w((in_ch, out_ch)) for _ in range(kernel_size)],
               "b1": w((1, out_ch)),
               "w2_taps": [w((out_ch, out_ch)) for _ in range(kernel_size)],
               "b2": w((1, out_ch))}
        if in_ch != out_ch:
            blk["wds"] = w((in_ch, out_ch))
            blk["bds"] = w((1, out_ch))
        blocks.append(blk)
        in_ch = out_ch
    params["blocks"] = blocks
    params["w_proj"] = w((dims[-1], c_out))
    params["b_proj"] = w((1, c_out))
    return params


def reference_forward(x, x_mark, y_mark, params, *, c_in, pred_len,
                      dilation_base=2, kernel_size=2):
    """Pure-JAX f32 forward mirroring the PyTorch TCN (inference mode)."""
    B, hist_len, _ = x.shape
    T = hist_len + pred_len
    x_p = jnp.concatenate([x, jnp.zeros((B, pred_len, c_in), x.dtype)], axis=1)
    marks = jnp.concatenate([x_mark, y_mark], axis=1)
    h = jnp.concatenate(
        [x_p, marks @ params["w_emb"] + params["b_emb"]], axis=-1)

    def causal_conv(u, taps, bias, d):
        out = jnp.zeros(u.shape[:2] + (taps[0].shape[1],), u.dtype) + bias
        for j in range(kernel_size):
            s = (kernel_size - 1 - j) * d
            if s == 0:
                u_s = u
            else:
                u_s = jnp.concatenate(
                    [jnp.zeros((B, s, u.shape[-1]), u.dtype), u[:, :T - s, :]],
                    axis=1)
            out = out + u_s @ taps[j]
        return out

    for i, blk in enumerate(params["blocks"]):
        d = dilation_base ** i
        a1 = jax.nn.relu(causal_conv(h, blk["w1_taps"], blk["b1"], d))
        a2 = jax.nn.relu(causal_conv(a1, blk["w2_taps"], blk["b2"], d))
        res = h @ blk["wds"] + blk["bds"] if "wds" in blk else h
        h = jax.nn.relu(a2 + res)

    out = h @ params["w_proj"] + params["b_proj"]
    return out[:, -pred_len:, :]


if __name__ == "__main__":
    B = 4
    c_in, c_out = 4, 4
    num_hidden_dimensions = [16, 16]
    hist_len, pred_len = 8, 4
    dilation_base, kernel_size, embedding_dim = 2, 2, 10
    freq = "H"
    d_inp = {"Y": 1, "M": 2, "D": 4, "B": 4, "H": 5, "T": 6, "S": 7}[freq]

    key = jax.random.PRNGKey(0)
    kx, kxm, kym, kp = jax.random.split(key, 4)
    x = jax.random.normal(kx, (B, hist_len, c_in), jnp.float32)
    x_mark = jax.random.normal(kxm, (B, hist_len, d_inp), jnp.float32)
    y_mark = jax.random.normal(kym, (B, pred_len, d_inp), jnp.float32)

    params = init_params(kp, c_in=c_in, c_out=c_out,
                         num_hidden_dimensions=num_hidden_dimensions,
                         embedding_dim=embedding_dim, d_inp=d_inp,
                         kernel_size=kernel_size)

    out = tcn_forward(x, x_mark, y_mark, params,
                      c_in=c_in, c_out=c_out,
                      num_hidden_dimensions=num_hidden_dimensions,
                      hist_len=hist_len, pred_len=pred_len,
                      dilation_base=dilation_base, kernel_size=kernel_size,
                      embedding_dim=embedding_dim, d_inp=d_inp,
                      batch_block=2)          # 2 parallel blocks (v7x megacore)
    out = jax.block_until_ready(out)

    ref = reference_forward(x, x_mark, y_mark, params,
                            c_in=c_in, pred_len=pred_len,
                            dilation_base=dilation_base,
                            kernel_size=kernel_size)

    assert out.shape == (B, pred_len, c_out), out.shape
    max_err = float(jnp.max(jnp.abs(out - ref)))
    # Tolerance covers bf16 MXU matmuls (f32 accumulation) vs. the f32
    # reference; structural bugs produce O(0.2+) errors and are still caught.
    assert max_err < 6e-2, max_err
    print("KERNEL_OK")
</pallas_src>

<mosaic_0001>
module attributes {stable_mosaic.version = 11 : i64} {
  func.func @_tcn_kernel(%arg0: i32, %arg1: memref<32x16xbf16, #tpu.memory_space<vmem>>, %arg2: memref<1296x128xbf16, #tpu.memory_space<vmem>>, %arg3: memref<8x128xf32, #tpu.memory_space<vmem>>, %arg4: memref<32x128xf32, #tpu.memory_space<vmem>>) attributes {dimension_semantics = [#tpu.dimension_semantics<parallel>], iteration_bounds = array<i64: 2>, scalar_prefetch = 0 : i64, scratch_operands = 0 : i64, tpu.core_type = #tpu.core_type<tc>, window_params = [{transform_indices = @transform_0, window_bounds = array<i64: 32, 16>}, {pipeline_mode = #tpu.pipeline_mode<synchronous>, transform_indices = @transform_1, window_bounds = array<i64: 1296, 128>}, {pipeline_mode = #tpu.pipeline_mode<synchronous>, transform_indices = @transform_2, window_bounds = array<i64: 8, 128>}, {transform_indices = @transform_3, window_bounds = array<i64: 32, 128>}]} {
    %0 = tpu.iota {dimensions = array<i32: 0>} : vector<32x1xi32>
    %c16_i32 = arith.constant 16 : i32
    %c0_i32 = arith.constant 0 : i32
    %1 = arith.cmpi eq, %c16_i32, %c0_i32 : i32
    %c1_i32 = arith.constant 1 : i32
    %2 = arith.select %1, %c1_i32, %c16_i32 : i32
    %3 = vector.broadcast %2 : i32 to vector<32x1xi32>
    %4 = arith.remsi %0, %3 : vector<32x1xi32>
    %c0_i32_0 = arith.constant 0 : i32
    %5 = vector.broadcast %c0_i32_0 : i32 to vector<32x1xi32>
    %6 = arith.cmpi ne, %4, %5 : vector<32x1xi32>
    %c0_i32_1 = arith.constant 0 : i32
    %7 = vector.broadcast %c0_i32_1 : i32 to vector<32x1xi32>
    %8 = arith.cmpi slt, %4, %7 : vector<32x1xi32>
    %c0_i32_2 = arith.constant 0 : i32
    %9 = arith.cmpi slt, %2, %c0_i32_2 : i32
    %10 = vector.broadcast %9 : i1 to vector<32x1xi1>
    %11 = vector.broadcast %10 : vector<32x1xi1> to vector<32x1xi1>
    %12 = arith.xori %8, %11 : vector<32x1xi1>
    %13 = arith.andi %12, %6 : vector<32x1xi1>
    %14 = vector.broadcast %2 : i32 to vector<32x1xi32>
    %15 = arith.addi %4, %14 : vector<32x1xi32>
    %16 = arith.select %13, %15, %4 : vector<32x1xi1>, vector<32x1xi32>
    %c1_i32_3 = arith.constant 1 : i32
    %17 = vector.broadcast %c1_i32_3 : i32 to vector<32x1xi32>
    %18 = arith.cmpi sge, %16, %17 : vector<32x1xi32>
    %19 = arith.extui %18 : vector<32x1xi1> to vector<32x1xi32>
    %20 = arith.sitofp %19 : vector<32x1xi32> to vector<32x1xf32>
    %c2_i32 = arith.constant 2 : i32
    %21 = vector.broadcast %c2_i32 : i32 to vector<32x1xi32>
    %22 = arith.cmpi sge, %16, %21 : vector<32x1xi32>
    %23 = arith.extui %22 : vector<32x1xi1> to vector<32x1xi32>
    %24 = arith.sitofp %23 : vector<32x1xi32> to vector<32x1xf32>
    %c0 = arith.constant 0 : index
    %c0_4 = arith.constant 0 : index
    %25 = vector.load %arg1[%c0, %c0_4] : memref<32x16xbf16, #tpu.memory_space<vmem>>, vector<32x16xbf16>
    %c0_5 = arith.constant 0 : index
    %c0_6 = arith.constant 0 : index
    %26 = vector.load %arg2[%c0_5, %c0_6] : memref<1296x128xbf16, #tpu.memory_space<vmem>>, vector<16x128xbf16>
    %cst = arith.constant dense<0.000000e+00> : vector<32x128xf32>
    %27 = tpu.matmul %25, %26, %cst {dimension_numbers = #tpu.dot_dimension_numbers<[1], [0], [0], [1], [0, 0, 1, 1], [], []>} : vector<32x16xbf16>, vector<16x128xbf16>, vector<32x128xf32> -> vector<32x128xf32>
    %c0_7 = arith.constant 0 : index
    %c0_8 = arith.constant 0 : index
    %28 = vector.load %arg3[%c0_7, %c0_8] : memref<8x128xf32, #tpu.memory_space<vmem>>, vector<1x128xf32>
    %29 = vector.broadcast %28 : vector<1x128xf32> to vector<32x128xf32>
    %30 = arith.addf %27, %29 : vector<32x128xf32>
    %c16 = arith.constant 16 : index
    %c0_9 = arith.constant 0 : index
    %31 = vector.load %arg2[%c16, %c0_9] : memref<1296x128xbf16, #tpu.memory_space<vmem>>, vector<256x128xbf16>
    %c1 = arith.constant 1 : index
    %c0_10 = arith.constant 0 : index
    %32 = vector.load %arg3[%c1, %c0_10] : memref<8x128xf32, #tpu.memory_space<vmem>>, vector<1x128xf32>
    %c1_i32_11 = arith.constant 1 : i32
    %33 = tpu.dynamic_rotate %30 by %c1_i32_11 dim 0 : vector<32x128xf32>, i32 -> vector<32x128xf32>
    %34 = vector.broadcast %20 : vector<32x1xf32> to vector<32x128xf32>
    %35 = arith.mulf %34, %33 : vector<32x128xf32>
    %36 = tpu.concatenate %35, %30 in 1 : vector<32x128xf32>, vector<32x128xf32> -> vector<32x256xf32>
    %37 = arith.truncf %36 : vector<32x256xf32> to vector<32x256xbf16>
    %cst_12 = arith.constant dense<0.000000e+00> : vector<32x128xf32>
    %38 = tpu.matmul %37, %31, %cst_12 {dimension_numbers = #tpu.dot_dimension_numbers<[1], [0], [0], [1], [0, 0, 1, 1], [], []>} : vector<32x256xbf16>, vector<256x128xbf16>, vector<32x128xf32> -> vector<32x128xf32>
    %39 = vector.broadcast %32 : vector<1x128xf32> to vector<32x128xf32>
    %40 = arith.addf %38, %39 : vector<32x128xf32>
    %cst_13 = arith.constant 0.000000e+00 : f32
    %41 = vector.broadcast %cst_13 : f32 to vector<32x128xf32>
    %42 = arith.maximumf %40, %41 : vector<32x128xf32>
    %c272 = arith.constant 272 : index
    %c0_14 = arith.constant 0 : index
    %43 = vector.load %arg2[%c272, %c0_14] : memref<1296x128xbf16, #tpu.memory_space<vmem>>, vector<256x128xbf16>
    %c2 = arith.constant 2 : index
    %c0_15 = arith.constant 0 : index
    %44 = vector.load %arg3[%c2, %c0_15] : memref<8x128xf32, #tpu.memory_space<vmem>>, vector<1x128xf32>
    %c1_i32_16 = arith.constant 1 : i32
    %45 = tpu.dynamic_rotate %42 by %c1_i32_16 dim 0 : vector<32x128xf32>, i32 -> vector<32x128xf32>
    %46 = vector.broadcast %20 : vector<32x1xf32> to vector<32x128xf32>
    %47 = arith.mulf %46, %45 : vector<32x128xf32>
    %48 = tpu.concatenate %47, %42 in 1 : vector<32x128xf32>, vector<32x128xf32> -> vector<32x256xf32>
    %49 = arith.truncf %48 : vector<32x256xf32> to vector<32x256xbf16>
    %cst_17 = arith.constant dense<0.000000e+00> : vector<32x128xf32>
    %50 = tpu.matmul %49, %43, %cst_17 {dimension_numbers = #tpu.dot_dimension_numbers<[1], [0], [0], [1], [0, 0, 1, 1], [], []>} : vector<32x256xbf16>, vector<256x128xbf16>, vector<32x128xf32> -> vector<32x128xf32>
    %51 = vector.broadcast %44 : vector<1x128xf32> to vector<32x128xf32>
    %52 = arith.addf %50, %51 : vector<32x128xf32>
    %cst_18 = arith.constant 0.000000e+00 : f32
    %53 = vector.broadcast %cst_18 : f32 to vector<32x128xf32>
    %54 = arith.maximumf %52, %53 : vector<32x128xf32>
    %c528 = arith.constant 528 : index
    %c0_19 = arith.constant 0 : index
    %55 = vector.load %arg2[%c528, %c0_19] : memref<1296x128xbf16, #tpu.memory_space<vmem>>, vector<128x128xbf16>
    %56 = arith.truncf %30 : vector<32x128xf32> to vector<32x128xbf16>
    %cst_20 = arith.constant dense<0.000000e+00> : vector<32x128xf32>
    %57 = tpu.matmul %56, %55, %cst_20 {dimension_numbers = #tpu.dot_dimension_numbers<[1], [0], [0], [1], [0, 0, 1, 1], [], []>} : vector<32x128xbf16>, vector<128x128xbf16>, vector<32x128xf32> -> vector<32x128xf32>
    %c3 = arith.constant 3 : index
    %c0_21 = arith.constant 0 : index
    %58 = vector.load %arg3[%c3, %c0_21] : memref<8x128xf32, #tpu.memory_space<vmem>>, vector<1x128xf32>
    %59 = vector.broadcast %58 : vector<1x128xf32> to vector<32x128xf32>
    %60 = arith.addf %57, %59 : vector<32x128xf32>
    %61 = arith.addf %54, %60 : vector<32x128xf32>
    %cst_22 = arith.constant 0.000000e+00 : f32
    %62 = vector.broadcast %cst_22 : f32 to vector<32x128xf32>
    %63 = arith.maximumf %61, %62 : vector<32x128xf32>
    %c656 = arith.constant 656 : index
    %c0_23 = arith.constant 0 : index
    %64 = vector.load %arg2[%c656, %c0_23] : memref<1296x128xbf16, #tpu.memory_space<vmem>>, vector<256x128xbf16>
    %c4 = arith.constant 4 : index
    %c0_24 = arith.constant 0 : index
    %65 = vector.load %arg3[%c4, %c0_24] : memref<8x128xf32, #tpu.memory_space<vmem>>, vector<1x128xf32>
    %c2_i32_25 = arith.constant 2 : i32
    %66 = tpu.dynamic_rotate %63 by %c2_i32_25 dim 0 : vector<32x128xf32>, i32 -> vector<32x128xf32>
    %67 = vector.broadcast %24 : vector<32x1xf32> to vector<32x128xf32>
    %68 = arith.mulf %67, %66 : vector<32x128xf32>
    %69 = tpu.concatenate %68, %63 in 1 : vector<32x128xf32>, vector<32x128xf32> -> vector<32x256xf32>
    %70 = arith.truncf %69 : vector<32x256xf32> to vector<32x256xbf16>
    %cst_26 = arith.constant dense<0.000000e+00> : vector<32x128xf32>
    %71 = tpu.matmul %70, %64, %cst_26 {dimension_numbers = #tpu.dot_dimension_numbers<[1], [0], [0], [1], [0, 0, 1, 1], [], []>} : vector<32x256xbf16>, vector<256x128xbf16>, vector<32x128xf32> -> vector<32x128xf32>
    %72 = vector.broadcast %65 : vector<1x128xf32> to vector<32x128xf32>
    %73 = arith.addf %71, %72 : vector<32x128xf32>
    %cst_27 = arith.constant 0.000000e+00 : f32
    %74 = vector.broadcast %cst_27 : f32 to vector<32x128xf32>
    %75 = arith.maximumf %73, %74 : vector<32x128xf32>
    %c912 = arith.constant 912 : index
    %c0_28 = arith.constant 0 : index
    %76 = vector.load %arg2[%c912, %c0_28] : memref<1296x128xbf16, #tpu.memory_space<vmem>>, vector<256x128xbf16>
    %c5 = arith.constant 5 : index
    %c0_29 = arith.constant 0 : index
    %77 = vector.load %arg3[%c5, %c0_29] : memref<8x128xf32, #tpu.memory_space<vmem>>, vector<1x128xf32>
    %c2_i32_30 = arith.constant 2 : i32
    %78 = tpu.dynamic_rotate %75 by %c2_i32_30 dim 0 : vector<32x128xf32>, i32 -> vector<32x128xf32>
    %79 = vector.broadcast %24 : vector<32x1xf32> to vector<32x128xf32>
    %80 = arith.mulf %79, %78 : vector<32x128xf32>
    %81 = tpu.concatenate %80, %75 in 1 : vector<32x128xf32>, vector<32x128xf32> -> vector<32x256xf32>
    %82 = arith.truncf %81 : vector<32x256xf32> to vector<32x256xbf16>
    %cst_31 = arith.constant dense<0.000000e+00> : vector<32x128xf32>
    %83 = tpu.matmul %82, %76, %cst_31 {dimension_numbers = #tpu.dot_dimension_numbers<[1], [0], [0], [1], [0, 0, 1, 1], [], []>} : vector<32x256xbf16>, vector<256x128xbf16>, vector<32x128xf32> -> vector<32x128xf32>
    %84 = vector.broadcast %77 : vector<1x128xf32> to vector<32x128xf32>
    %85 = arith.addf %83, %84 : vector<32x128xf32>
    %cst_32 = arith.constant 0.000000e+00 : f32
    %86 = vector.broadcast %cst_32 : f32 to vector<32x128xf32>
    %87 = arith.maximumf %85, %86 : vector<32x128xf32>
    %88 = arith.addf %87, %63 : vector<32x128xf32>
    %cst_33 = arith.constant 0.000000e+00 : f32
    %89 = vector.broadcast %cst_33 : f32 to vector<32x128xf32>
    %90 = arith.maximumf %88, %89 : vector<32x128xf32>
    %c1168 = arith.constant 1168 : index
    %c0_34 = arith.constant 0 : index
    %91 = vector.load %arg2[%c1168, %c0_34] : memref<1296x128xbf16, #tpu.memory_space<vmem>>, vector<128x128xbf16>
    %92 = arith.truncf %90 : vector<32x128xf32> to vector<32x128xbf16>
    %cst_35 = arith.constant dense<0.000000e+00> : vector<32x128xf32>
    %93 = tpu.matmul %92, %91, %cst_35 {dimension_numbers = #tpu.dot_dimension_numbers<[1], [0], [0], [1], [0, 0, 1, 1], [], []>} : vector<32x128xbf16>, vector<128x128xbf16>, vector<32x128xf32> -> vector<32x128xf32>
    %c6 = arith.constant 6 : index
    %c0_36 = arith.constant 0 : index
    %94 = vector.load %arg3[%c6, %c0_36] : memref<8x128xf32, #tpu.memory_space<vmem>>, vector<1x128xf32>
    %95 = vector.broadcast %94 : vector<1x128xf32> to vector<32x128xf32>
    %96 = arith.addf %93, %95 : vector<32x128xf32>
    %c0_37 = arith.constant 0 : index
    %c0_38 = arith.constant 0 : index
    %97 = vector.load %arg4[%c0_37, %c0_38] : memref<32x128xf32, #tpu.memory_space<vmem>>, vector<32x128xf32>
    tpu.vector_store %arg4[%c0_37, %c0_38], %96 {strides = array<i32>} : memref<32x128xf32, #tpu.memory_space<vmem>>, vector<32x128xf32>,
    return
  }
  func.func @transform_0(%arg0: i32) -> (i32, i32) {
    %c0_i32 = arith.constant 0 : i32
    %c0_i32_0 = arith.constant 0 : i32
    return %arg0, %c0_i32 : i32, i32
  }
  func.func @transform_1(%arg0: i32) -> (i32, i32) {
    %c0_i32 = arith.constant 0 : i32
    %c0_i32_0 = arith.constant 0 : i32
    %c0_i32_1 = arith.constant 0 : i32
    return %c0_i32, %c0_i32_0 : i32, i32
  }
  func.func @transform_2(%arg0: i32) -> (i32, i32) {
    %c0_i32 = arith.constant 0 : i32
    %c0_i32_0 = arith.constant 0 : i32
    %c0_i32_1 = arith.constant 0 : i32
    return %c0_i32, %c0_i32_0 : i32, i32
  }
  func.func @transform_3(%arg0: i32) -> (i32, i32) {
    %c0_i32 = arith.constant 0 : i32
    %c0_i32_0 = arith.constant 0 : i32
    return %arg0, %c0_i32 : i32, i32
  }
}

</mosaic_0001>

<llo_original>
// kernel: tpu_custom_call.1
$region0: #{tpu_custom_call.1}
  #allocation0 [shape = 'u32[]', space=smem, size = 0x4, offset = 0x4, fixed_abs, tag = 'smem constant byte address 0x4 - core index']
  #allocation1 [shape = 'u32[144,128]{1,0:T(1,128)}', space=vmem, size = 0x12000, scoped, tag = 'internal scratch']
  %s0 = inlined_call_operand.vmem [shape: bf16[64,16], index: 0, kind: input, shape index: {}]
  %s1 = inlined_call_operand.hbm [shape: bf16[1296,128], index: 1, kind: input, shape index: {}]
  %s2 = inlined_call_operand.vmem [shape: f32[8,128], index: 2, kind: input, shape index: {}]
  %s3 = inlined_call_operand.hbm [shape: f32[64,128], index: 3, kind: output, shape index: {}]
  %s4 = sld [smem:[#allocation0]]
  $region49: #{tpu_custom_call.1} parent=0
    _
  %s6 = ssub.s32 1, %s4
  %s7 = scalar_select 0, %s6, %s4
  $region1: #{tpu_custom_call.1} parent=0
    #allocation2 [shape = 'u8[331776]{0}', space=vmem, size = 0x51000, scoped, tag = 'input window, operand 1, single buffered']
    #allocation3 [shape = 's32[2]{0}', space=sflag, size = 0x8, scoped, tag = 'scoped memory for tpu_custom_call.1']
    #allocation4 [shape = 's32[2]{0}', space=sflag, size = 0x8, scoped, tag = 'scoped memory for tpu_custom_call.1']
    #allocation5 [shape = 'u8[32768]{0}', space=vmem, size = 0x8000, scoped, tag = 'output window, operand 0']
    %8 = vsyncpa [#allocation3], 0
    %9 = vsyncpa [#allocation4], 0
    %s10 = scalar_lea.sflag [#allocation4], 1
    %11 = vsyncpa %s10, 0
    loop: start=0, step=1, limit=4
    $region2: #{tpu_custom_call.1} parent=1 // loop_pre_header
      _
    $region3: #{tpu_custom_call.1} parent=1 // loop_header
      %s13 = sphi 0, %s17
      %p14 = scmp.ge.s32.totalorder %s13, 4
      %s23 = sphi 0, %s25
      %s26 = sphi 0, %s23
      %s27 = sphi 0, %s26
      %s43 = sphi 0, %s27
      %s47 = sphi 0, %s47
      %s49 = sphi 0, %s47
      %s50 = sphi 0, %s49
      %s64 = sphi 0, %s50
      %s68 = sphi 0, %s68
      %s70 = sphi 0, %s68
      %s71 = sphi 0, %s70
      %s85 = sphi 0, %s71
      %s91 = sphi 0, %s93
      %s94 = sphi 0, %s91
      %s95 = sphi 0, %s94
      %s111 = sphi 0, %s95
    $region4: #{tpu_custom_call.1} parent=1 // loop_header_branch
      %16 = sbr.rel (%p14) target = $region8
    $region5: #{tpu_custom_call.1} parent=1 // loop_body
      %s18 = ssub.s32 %s13, 1
      %s19 = ssub.s32 %s13, 2
      %s20 = sadd.s32 %s13, 1
      %s21 = ssub.s32 %s13, %s20
      %p22 = scmp.eq.s32.totalorder %s21, 0
      %s24 = sadd.s32 %s23, 1
      %s25 = scalar_select %p22, %s23, %s24
      %p28 = pneg %p22
      %p29 = scmp.eq.s32.totalorder %s13, 1
      %p30 = por %p28, %p29
      %p31 = scmp.ne.s32.totalorder %s23, %s26
      %p32 = scmp.eq.s32.totalorder %s13, 0
      %p33 = por %p31, %p32
      %p34 = scmp.ne.s32.totalorder %s23, %s26
      %p35 = scmp.eq.s32.totalorder %s18, 1
      %p36 = por %p34, %p35
      %p37 = scmp.ne.s32.totalorder %s26, %s27
      %p38 = scmp.eq.s32.totalorder %s18, 0
      %p39 = por %p37, %p38
      %p40 = scmp.ne.s32.totalorder %s26, %s27
      %p41 = scmp.eq.s32.totalorder %s19, 1
      %p42 = por %p40, %p41
      %p44 = scmp.ne.s32.totalorder %s27, %s43
      %p45 = scmp.eq.s32.totalorder %s19, 0
      %p46 = por %p44, %p45
      %s48 = sadd.s32 %s47, 1
      %p51 = scmp.eq.s32.totalorder %s13, 1
      %p52 = scmp.ne.s32.totalorder %s47, %s49
      %p53 = scmp.eq.s32.totalorder %s13, 0
      %p54 = por %p52, %p53
      %p55 = scmp.ne.s32.totalorder %s47, %s49
      %p56 = scmp.eq.s32.totalorder %s18, 1
      %p57 = por %p55, %p56
      %p58 = scmp.ne.s32.totalorder %s49, %s50
      %p59 = scmp.eq.s32.totalorder %s18, 0
      %p60 = por %p58, %p59
      %p61 = scmp.ne.s32.totalorder %s49, %s50
      %p62 = scmp.eq.s32.totalorder %s19, 1
      %p63 = por %p61, %p62
      %p65 = scmp.ne.s32.totalorder %s50, %s64
      %p66 = scmp.eq.s32.totalorder %s19, 0
      %p67 = por %p65, %p66
      %s69 = sadd.s32 %s68, 1
      %p72 = scmp.eq.s32.totalorder %s13, 1
      %p73 = scmp.ne.s32.totalorder %s68, %s70
      %p74 = scmp.eq.s32.totalorder %s13, 0
      %p75 = por %p73, %p74
      %p76 = scmp.ne.s32.totalorder %s68, %s70
      %p77 = scmp.eq.s32.totalorder %s18, 1
      %p78 = por %p76, %p77
      %p79 = scmp.ne.s32.totalorder %s70, %s71
      %p80 = scmp.eq.s32.totalorder %s18, 0
      %p81 = por %p79, %p80
      %p82 = scmp.ne.s32.totalorder %s70, %s71
      %p83 = scmp.eq.s32.totalorder %s19, 1
      %p84 = por %p82, %p83
      %p86 = scmp.ne.s32.totalorder %s71, %s85
      %p87 = scmp.eq.s32.totalorder %s19, 0
      %p88 = por %p86, %p87
      %s89 = ssub.s32 %s13, %s20
      %p90 = scmp.eq.s32.totalorder %s89, 0
      %s92 = sadd.s32 %s91, 1
      %s93 = scalar_select %p90, %s91, %s92
      %p96 = pneg %p90
      %p97 = scmp.eq.s32.totalorder %s13, 1
      %p98 = por %p96, %p97
      %p99 = scmp.ne.s32.totalorder %s91, %s94
      %p100 = scmp.eq.s32.totalorder %s13, 0
      %p101 = por %p99, %p100
      %p102 = scmp.ne.s32.totalorder %s91, %s94
      %p103 = scmp.eq.s32.totalorder %s18, 1
      %p104 = por %p102, %p103
      %p105 = scmp.ne.s32.totalorder %s94, %s95
      %p106 = scmp.eq.s32.totalorder %s18, 0
      %p107 = por %p105, %p106
      %p108 = scmp.ne.s32.totalorder %s94, %s95
      %p109 = scmp.eq.s32.totalorder %s19, 1
      %p110 = por %p108, %p109
      %p112 = scmp.ne.s32.totalorder %s95, %s111
      %p113 = scmp.eq.s32.totalorder %s19, 0
      %p114 = por %p112, %p113
      %p115 = scmp.le.s32.totalorder 1, %s13
      %p116 = scmp.lt.s32.totalorder %s13, 3
      %p117 = pnand %p115, %p116
      %p118 = pneg %p117
      // Predicated region
      $region9: #{tpu_custom_call.1} parent=5 // pred_check
        _
      $region10: #{tpu_custom_call.1} parent=5 // pred_check_branch
        %120 = sbr.rel (%p117) target = $region12
      $region11: #{tpu_custom_call.1} parent=5 // pred_region
        %s121 = ssub.s32 %s13, 1
        // Predicated region
        $region13: #{tpu_custom_call.1} parent=11 // pred_check
          %p122 = pneg %p60
        $region14: #{tpu_custom_call.1} parent=11 // pred_check_branch
          %124 = sbr.rel (%p122) target = $region16
        $region15: #{tpu_custom_call.1} parent=11 // pred_region
          %s126 = ssub.s32 10368, 10368
          %127 = vsyncadd [#allocation3], %s126
          %s128 = sshll.u32 [#allocation2], 4
          %s129 = int_to_ptr.vmem [resolvable:$true] %s128
          %134 = dma.hbm_to_vmem [thread:$0]  %s1, 10368, %s129, [#allocation3], 64, 64, 4
        $region16: #{tpu_custom_call.1} parent=11 // pred_fallthru
          _
        // Predicated region
        $region17: #{tpu_custom_call.1} parent=11 // pred_check
          %p135 = pneg %p81
        $region18: #{tpu_custom_call.1} parent=11 // pred_check_branch
          %137 = sbr.rel (%p135) target = $region20
        $region19: #{tpu_custom_call.1} parent=11 // pred_region
          _
        $region20: #{tpu_custom_call.1} parent=11 // pred_fallthru
          _
      $region12: #{tpu_custom_call.1} parent=5 // pred_fallthru
        _
      %p138 = scmp.lt.s32.totalorder %s13, 2
      // Predicated region
      $region21: #{tpu_custom_call.1} parent=5 // pred_check
        %p139 = pneg %p138
      $region22: #{tpu_custom_call.1} parent=5 // pred_check_branch
        %141 = sbr.rel (%p139) target = $region24
      $region23: #{tpu_custom_call.1} parent=5 // pred_region
        // Predicated region
        $region25: #{tpu_custom_call.1} parent=23 // pred_check
          %p142 = pneg %p33
        $region26: #{tpu_custom_call.1} parent=23 // pred_check_branch
          %144 = sbr.rel (%p142) target = $region28
        $region27: #{tpu_custom_call.1} parent=23 // pred_region
          %s145 = smul.u32 4, %s13
          %p146 = scmp.lt.s32.totalorder %s145, 7
          %s147 = scalar_select %p146, %s145, 7
          %s148 = smul.addr %s147, 4
          %s149 = scalar_lea.vmem %s0, %s148
          %s150 = smul.u32 4, %s13
        $region28: #{tpu_custom_call.1} parent=23 // pred_fallthru
          _
      $region24: #{tpu_custom_call.1} parent=5 // pred_fallthru
        _
      %p151 = scmp.le.s32.totalorder 1, %s13
      %p152 = scmp.lt.s32.totalorder %s13, 3
      %p153 = pnand %p151, %p152
      %p154 = pneg %p153
      // Predicated region
      $region29: #{tpu_custom_call.1} parent=5 // pred_check
        _
      $region30: #{tpu_custom_call.1} parent=5 // pred_check_branch
        %156 = sbr.rel (%p153) target = $region32
      $region31: #{tpu_custom_call.1} parent=5 // pred_region
        %s157 = ssub.s32 %s13, 1
        // Predicated region
        $region33: #{tpu_custom_call.1} parent=31 // pred_check
          %p158 = pneg %p60
        $region34: #{tpu_custom_call.1} parent=31 // pred_check_branch
          %160 = sbr.rel (%p158) target = $region36
        $region35: #{tpu_custom_call.1} parent=31 // pred_region
          %161 = dma.done [#allocation3], 10368
        $region36: #{tpu_custom_call.1} parent=31 // pred_fallthru
          _
        %s162 = smul.u32 4, %s18
        %p163 = scmp.lt.s32.totalorder %s162, 7
        %s164 = scalar_select %p163, %s162, 7
        %s165 = smul.addr %s164, 4
        %s166 = scalar_lea.vmem %s0, %s165
        %p167 = pneg %p39
        %p168 = pneg %p36
        %p169 = pneg %p60
        %p170 = pneg %p57
        %p171 = pneg %p81
        %p172 = pneg %p78
        %p173 = pneg %p107
        %p174 = pneg %p104
        %s175 = sand.u32 %s94, 1
        %s176 = scalar_lea.sflag [#allocation4], %s175
        %s177 = sand.u32 %s94, 1
        %s178 = smul.addr %s177, 32
        %s179 = scalar_lea.vmem [#allocation5], %s178
        %s180 = smul.u32 4, %s18
        %p181 = scmp.lt.s32.totalorder %s180, 7
        %s182 = scalar_select %p181, %s180, 7
        %s183 = smul.addr %s182, 4
        %s184 = scalar_lea.vmem %s0, %s183
        %s185 = smul.u32 4, %s18
        %s186 = smul.u32 4, %s18
        %v188 = vlaneseq
        %v189 = vshrl.u32 %v188, 7
        %v190 = vadd.s32 %v189, 8
        %v191 = vadd.s32 %v189, 16
        %v192 = vadd.s32 %v189, 24
        %vm193 = vcmp.lt.s32.totalorder %v189, 0
        %v194 = vsub.s32 0, %v189
        %v195 = vsel %vm193, %v194, %v189
        %v196 = vshrl.u32 %v195, 4
        %v197 = vand.u32 %v195, 15
        %v198 = vsub.s32 0, %v197
        %v199 = vsel %vm193, %v198, %v197
        %vm200 = vcmp.lt.s32.totalorder %v190, 0
        %v201 = vsub.s32 0, %v190
        %v202 = vsel %vm200, %v201, %v190
        %v203 = vshrl.u32 %v202, 4
        %v204 = vand.u32 %v202, 15
        %v205 = vsub.s32 0, %v204
        %v206 = vsel %vm200, %v205, %v204
        %vm207 = vcmp.lt.s32.totalorder %v191, 0
        %v208 = vsub.s32 0, %v191
        %v209 = vsel %vm207, %v208, %v191
        %v210 = vshrl.u32 %v209, 4
        %v211 = vand.u32 %v209, 15
        %v212 = vsub.s32 0, %v211
        %v213 = vsel %vm207, %v212, %v211
        %vm214 = vcmp.lt.s32.totalorder %v192, 0
        %v215 = vsub.s32 0, %v192
        %v216 = vsel %vm214, %v215, %v192
        %v217 = vshrl.u32 %v216, 4
        %v218 = vand.u32 %v216, 15
        %v219 = vsub.s32 0, %v218
        %v220 = vsel %vm214, %v219, %v218
        %vm221 = vcmp.ne.s32.totalorder %v199, 0
        %vm222 = vcmp.ne.s32.totalorder %v206, 0
        %vm223 = vcmp.ne.s32.totalorder %v213, 0
        %vm224 = vcmp.ne.s32.totalorder %v220, 0
        %vm225 = vcmp.lt.s32.totalorder %v199, 0
        %vm226 = vcmp.lt.s32.totalorder %v206, 0
        %vm227 = vcmp.lt.s32.totalorder %v213, 0
        %vm228 = vcmp.lt.s32.totalorder %v220, 0
        %vm229 = vmand %vm225, %vm221
        %vm230 = vmand %vm226, %vm222
        %vm231 = vmand %vm227, %vm223
        %vm232 = vmand %vm228, %vm224
        %v233 = vadd.s32 %v199, 16
        %v234 = vadd.s32 %v206, 16
        %v235 = vadd.s32 %v213, 16
        %v236 = vadd.s32 %v220, 16
        %v237 = vsel %vm229, %v233, %v199
        %v238 = vsel %vm230, %v234, %v206
        %v239 = vsel %vm231, %v235, %v213
        %v240 = vsel %vm232, %v236, %v220
        %vm241 = vcmp.ge.s32.totalorder %v237, 1
        %vm242 = vcmp.ge.s32.totalorder %v238, 1
        %vm243 = vcmp.ge.s32.totalorder %v239, 1
        %vm244 = vcmp.ge.s32.totalorder %v240, 1
        %v245 = vsel %vm241, 1, 0
        %v246 = vsel %vm242, 1, 0
        %v247 = vsel %vm243, 1, 0
        %v248 = vsel %vm244, 1, 0
        %v249 = vcvt.s32.f32 %v245
        %v250 = vcvt.s32.f32 %v246
        %v251 = vcvt.s32.f32 %v247
        %v252 = vcvt.s32.f32 %v248
        %vm253 = vcmp.ge.s32.totalorder %v237, 2
        %vm254 = vcmp.ge.s32.totalorder %v238, 2
        %vm255 = vcmp.ge.s32.totalorder %v239, 2
        %vm256 = vcmp.ge.s32.totalorder %v240, 2
        %v257 = vsel %vm253, 1, 0
        %v258 = vsel %vm254, 1, 0
        %v259 = vsel %vm255, 1, 0
        %v260 = vsel %vm256, 1, 0
        %v261 = vcvt.s32.f32 %v257
        %v262 = vcvt.s32.f32 %v258
        %v263 = vcvt.s32.f32 %v259
        %v264 = vcvt.s32.f32 %v260
        %v265 = vld [vmem:[%s184] sm:$0xf]
        %v266 = vld [vmem:[%s184 + $0x4] sm:$0xf]
        %v267 = vld [vmem:[%s184 + $0x8] sm:$0xf]
        %v268 = vld [vmem:[%s184 + $0xc] sm:$0xf]
        %v269 = vld [vmem:[#allocation2] sm:$0xf]
        %v270 = vld [vmem:[#allocation2 + $0x4] sm:$0xf]
        %v271 = vld [vmem:[%s2] sm:$0x1]
        %v272 = vlaneseq
        %v273 = vshrl.u32 %v272, 7
        %v274 = vsub.s32 0, %v273
        %v275 = vrot.slane %v271, %v274
        %v280 = vunpack.c.l.b16 %v265
        %v281 = vunpack.c.l.b16 %v266
        %v282 = vunpack.c.l.b16 %v267
        %v283 = vunpack.c.l.b16 %v268
        %v284 = vpack.c.b16 %v281, %v280
        %v285 = vpack.c.b16 %v283, %v282
        %v288 = vunpack.c.l.b16 %v269
        %v289 = vunpack.c.l.b16 %v270
        %v290 = vpack.c.b16 %v289, %v288
        %vm292 = vcmask 130048
        %v294 = vsel %vm292, %v284, 0
        %v297 = vsel %vm292, %v285, 0
        %299 = vmatprep.subr.bf16.mxu0 0
        %300 = vmatpush1.bf16.msra.mxu0 0
        %301 = vmatprep.subr.bf16.mxu0 0
        %302 = vmatpush1.bf16.msra.mxu0 0
        %303 = vmatprep.subr.bf16.mxu0 0
        %304 = vmatpush1.bf16.msra.mxu0 0
        %305 = vmatprep.subr.bf16.mxu0 0
        %306 = vmatpush1.bf16.msra.mxu0 0
        %307 = vmatprep.subr.bf16.mxu0 0
        %308 = vmatpush1.bf16.msra.mxu0 0
        %309 = vmatprep.subr.bf16.mxu0 0
        %310 = vmatpush1.bf16.msra.mxu0 0
        %311 = vmatprep.subr.bf16.mxu0 0
        %312 = vmatpush1.bf16.msra.mxu0 0
        %313 = vmatprep.subr.bf16.mxu0 0
        %314 = vmatpush1.bf16.msra.mxu0 %v290
        %315 = vmatprep.subr.bf16.mxu0 0
        %316 = vmatpush2.bf16.msra.mxu0 0
        %317 = vmatprep.subr.bf16.mxu0 0
        %318 = vmatpush2.bf16.msra.mxu0 0
        %319 = vmatprep.subr.bf16.mxu0 0
        %320 = vmatpush2.bf16.msra.mxu0 0
        %321 = vmatprep.subr.bf16.mxu0 0
        %322 = vmatpush2.bf16.msra.mxu0 0
        %323 = vmatprep.subr.bf16.mxu0 0
        %324 = vmatpush2.bf16.msra.mxu0 0
        %325 = vmatprep.subr.bf16.mxu0 0
        %326 = vmatpush2.bf16.msra.mxu0 0
        %327 = vmatprep.subr.bf16.mxu0 0
        %328 = vmatpush2.bf16.msra.mxu0 0
        %329 = vmatprep.subr.bf16.mxu0 0
        %330 = vmatpush2.bf16.msra.mxu0 0
        %331 = vmatprep.mubr.bf16.mxu0 0
        %332 = vmatmul.mubr.bf16.gmra.mxu0 %v294
        %v333 = vpop.f32.mrf.mxu0
        %v334 = vadd.f32 %v275, %v333
        %v335 = vpop.f32.mrf.mxu0
        %v336 = vpop.f32.mrf.mxu0
        %v337 = vadd.f32 %v275, %v336
        %v338 = vpop.f32.mrf.mxu0
        %339 = vmatprep.mubr.bf16.mxu0 0
        %340 = vmatmul.mubr.bf16.gmra.mxu0 %v297
        %v341 = vpop.f32.mrf.mxu0
        %v342 = vadd.f32 %v275, %v341
        %v343 = vpop.f32.mrf.mxu0
        %v344 = vpop.f32.mrf.mxu0
        %v345 = vadd.f32 %v275, %v344
        %v346 = vpop.f32.mrf.mxu0
        %347 = vdwg.mxu0
        %v348 = vld [vmem:[#allocation2 + $0x8] sm:$0xf]
        %v349 = vld [vmem:[#allocation2 + $0xc] sm:$0xf]
        %v350 = vld [vmem:[#allocation2 + $0x10] sm:$0xf]
        %v351 = vld [vmem:[#allocation2 + $0x14] sm:$0xf]
        %v352 = vld [vmem:[#allocation2 + $0x18] sm:$0xf]
        %v353 = vld [vmem:[#allocation2 + $0x1c] sm:$0xf]
        %v354 = vld [vmem:[#allocation2 + $0x20] sm:$0xf]
        %v355 = vld [vmem:[#allocation2 + $0x24] sm:$0xf]
        %v356 = vld [vmem:[#allocation2 + $0x28] sm:$0xf]
        %v357 = vld [vmem:[#allocation2 + $0x2c] sm:$0xf]
        %v358 = vld [vmem:[#allocation2 + $0x30] sm:$0xf]
        %v359 = vld [vmem:[#allocation2 + $0x34] sm:$0xf]
        %v360 = vld [vmem:[#allocation2 + $0x38] sm:$0xf]
        %v361 = vld [vmem:[#allocation2 + $0x3c] sm:$0xf]
        %v362 = vld [vmem:[#allocation2 + $0x40] sm:$0xf]
        %v363 = vld [vmem:[#allocation2 + $0x44] sm:$0xf]
        %v364 = vld [vmem:[#allocation2 + $0x48] sm:$0xf]
        %v365 = vld [vmem:[#allocation2 + $0x4c] sm:$0xf]
        %v366 = vld [vmem:[#allocation2 + $0x50] sm:$0xf]
        %v367 = vld [vmem:[#allocation2 + $0x54] sm:$0xf]
        %v368 = vld [vmem:[#allocation2 + $0x58] sm:$0xf]
        %v369 = vld [vmem:[#allocation2 + $0x5c] sm:$0xf]
        %v370 = vld [vmem:[#allocation2 + $0x60] sm:$0xf]
        %v371 = vld [vmem:[#allocation2 + $0x64] sm:$0xf]
        %v372 = vld [vmem:[#allocation2 + $0x68] sm:$0xf]
        %v373 = vld [vmem:[#allocation2 + $0x6c] sm:$0xf]
        %v374 = vld [vmem:[#allocation2 + $0x70] sm:$0xf]
        %v375 = vld [vmem:[#allocation2 + $0x74] sm:$0xf]
        %v376 = vld [vmem:[#allocation2 + $0x78] sm:$0xf]
        %v377 = vld [vmem:[#allocation2 + $0x7c] sm:$0xf]
        %v378 = vld [vmem:[#allocation2 + $0x80] sm:$0xf]
        %v379 = vld [vmem:[#allocation2 + $0x84] sm:$0xf]
        %v380 = vld [vmem:[%s2 + $0x1] sm:$0x1]
        %v381 = vrot.slane %v334, 7
        %v382 = vrot.slane %v337, 7
        %v383 = vrot.slane %v342, 7
        %v384 = vrot.slane %v345, 7
        %vm385 = vcmp.lt.s32.totalorder %v189, 1
        %v386 = vsel %vm385, %v383, %v384
        %v387 = vsel %vm385, %v382, %v383
        %v388 = vsel %vm385, %v381, %v382
        %v389 = vsel %vm385, %v384, %v381
        %v390 = vmul.f32 %v249, %v389
        %v391 = vmul.f32 %v250, %v388
        %v392 = vmul.f32 %v251, %v387
        %v393 = vmul.f32 %v252, %v386
        %v394 = vpack.c.bf16 %v391, %v390
        %v395 = vpack.c.bf16 %v337, %v334
        %v396 = vpack.c.bf16 %v393, %v392
        %v397 = vpack.c.bf16 %v345, %v342
        %v398 = vlaneseq
        %v399 = vshrl.u32 %v398, 7
        %v400 = vsub.s32 0, %v399
        %v401 = vrot.slane %v380, %v400
        %v434 = vunpack.c.l.b16 %v348
        %v435 = vunpack.c.l.b16 %v349
        %v436 = vunpack.c.l.b16 %v350
        %v437 = vunpack.c.l.b16 %v351
        %v438 = vunpack.c.l.b16 %v352
        %v439 = vunpack.c.l.b16 %v353
        %v440 = vunpack.c.l.b16 %v354
        %v441 = vunpack.c.l.b16 %v355
        %v442 = vunpack.c.l.b16 %v356
        %v443 = vunpack.c.l.b16 %v357
        %v444 = vunpack.c.l.b16 %v358
        %v445 = vunpack.c.l.b16 %v359
        %v446 = vunpack.c.l.b16 %v360
        %v447 = vunpack.c.l.b16 %v361
        %v448 = vunpack.c.l.b16 %v362
        %v449 = vunpack.c.l.b16 %v363
        %v450 = vunpack.c.l.b16 %v364
        %v451 = vunpack.c.l.b16 %v365
        %v452 = vunpack.c.l.b16 %v366
        %v453 = vunpack.c.l.b16 %v367
        %v454 = vunpack.c.l.b16 %v368
        %v455 = vunpack.c.l.b16 %v369
        %v456 = vunpack.c.l.b16 %v370
        %v457 = vunpack.c.l.b16 %v371
        %v458 = vunpack.c.l.b16 %v372
        %v459 = vunpack.c.l.b16 %v373
        %v460 = vunpack.c.l.b16 %v374
        %v461 = vunpack.c.l.b16 %v375
        %v462 = vunpack.c.l.b16 %v376
        %v463 = vunpack.c.l.b16 %v377
        %v464 = vunpack.c.l.b16 %v378
        %v465 = vunpack.c.l.b16 %v379
        %v466 = vpack.c.b16 %v435, %v434
        %v467 = vpack.c.b16 %v437, %v436
        %v468 = vpack.c.b16 %v439, %v438
        %v469 = vpack.c.b16 %v441, %v440
        %v470 = vpack.c.b16 %v443, %v442
        %v471 = vpack.c.b16 %v445, %v444
        %v472 = vpack.c.b16 %v447, %v446
        %v473 = vpack.c.b16 %v449, %v448
        %v474 = vpack.c.b16 %v451, %v450
        %v475 = vpack.c.b16 %v453, %v452
        %v476 = vpack.c.b16 %v455, %v454
        %v477 = vpack.c.b16 %v457, %v456
        %v478 = vpack.c.b16 %v459, %v458
        %v479 = vpack.c.b16 %v461, %v460
        %v480 = vpack.c.b16 %v463, %v462
        %v481 = vpack.c.b16 %v465, %v464
        %498 = vmatprep.subr.bf16.mxu0 0
        %499 = vmatpush1.bf16.msra.mxu0 %v473
        %500 = vmatprep.subr.bf16.mxu0 0
        %501 = vmatpush1.bf16.msra.mxu0 %v472
        %502 = vmatprep.subr.bf16.mxu0 0
        %503 = vmatpush1.bf16.msra.mxu0 %v471
        %504 = vmatprep.subr.bf16.mxu0 0
        %505 = vmatpush1.bf16.msra.mxu0 %v470
        %506 = vmatprep.subr.bf16.mxu0 0
        %507 = vmatpush1.bf16.msra.mxu0 %v469
        %508 = vmatprep.subr.bf16.mxu0 0
        %509 = vmatpush1.bf16.msra.mxu0 %v468
        %510 = vmatprep.subr.bf16.mxu0 0
        %511 = vmatpush1.bf16.msra.mxu0 %v467
        %512 = vmatprep.subr.bf16.mxu0 0
        %513 = vmatpush1.bf16.msra.mxu0 %v466
        %514 = vmatprep.subr.bf16.mxu0 0
        %515 = vmatpush2.bf16.msra.mxu0 %v481
        %516 = vmatprep.subr.bf16.mxu0 0
        %517 = vmatpush2.bf16.msra.mxu0 %v480
        %518 = vmatprep.subr.bf16.mxu0 0
        %519 = vmatpush2.bf16.msra.mxu0 %v479
        %520 = vmatprep.subr.bf16.mxu0 0
        %521 = vmatpush2.bf16.msra.mxu0 %v478
        %522 = vmatprep.subr.bf16.mxu0 0
        %523 = vmatpush2.bf16.msra.mxu0 %v477
        %524 = vmatprep.subr.bf16.mxu0 0
        %525 = vmatpush2.bf16.msra.mxu0 %v476
        %526 = vmatprep.subr.bf16.mxu0 0
        %527 = vmatpush2.bf16.msra.mxu0 %v475
        %528 = vmatprep.subr.bf16.mxu0 0
        %529 = vmatpush2.bf16.msra.mxu0 %v474
        %530 = vmatprep.mubr.bf16.mxu0 %v395
        %531 = vmatmul.mubr.bf16.gmra.mxu0 %v394
        %v532 = vpop.f32.mrf.mxu0
        %v533 = vadd.f32 %v401, %v532
        %v534 = vpop.f32.mrf.mxu0
        %v535 = vpop.f32.mrf.mxu0
        %v536 = vadd.f32 %v401, %v535
        %v537 = vpop.f32.mrf.mxu0
        %538 = vmatprep.mubr.bf16.mxu0 %v397
        %539 = vmatmul.mubr.bf16.gmra.mxu0 %v396
        %v540 = vpop.f32.mrf.mxu0
        %v541 = vadd.f32 %v401, %v540
        %v542 = vpop.f32.mrf.mxu0
        %v543 = vpop.f32.mrf.mxu0
        %v544 = vadd.f32 %v401, %v543
        %v545 = vpop.f32.mrf.mxu0
        %546 = vdwg.mxu0
        %v547 = vmax.f32 %v533, 0.0
        %v548 = vmax.f32 %v536, 0.0
        %v549 = vmax.f32 %v541, 0.0
        %v550 = vmax.f32 %v544, 0.0
        %v551 = vld [vmem:[#allocation2 + $0x88] sm:$0xf]
        %v552 = vld [vmem:[#allocation2 + $0x8c] sm:$0xf]
        %v553 = vld [vmem:[#allocation2 + $0x90] sm:$0xf]
        %v554 = vld [vmem:[#allocation2 + $0x94] sm:$0xf]
        %v555 = vld [vmem:[#allocation2 + $0x98] sm:$0xf]
        %v556 = vld [vmem:[#allocation2 + $0x9c] sm:$0xf]
        %v557 = vld [vmem:[#allocation2 + $0xa0] sm:$0xf]
        %v558 = vld [vmem:[#allocation2 + $0xa4] sm:$0xf]
        %v559 = vld [vmem:[#allocation2 + $0xa8] sm:$0xf]
        %v560 = vld [vmem:[#allocation2 + $0xac] sm:$0xf]
        %v561 = vld [vmem:[#allocation2 + $0xb0] sm:$0xf]
        %v562 = vld [vmem:[#allocation2 + $0xb4] sm:$0xf]
        %v563 = vld [vmem:[#allocation2 + $0xb8] sm:$0xf]
        %v564 = vld [vmem:[#allocation2 + $0xbc] sm:$0xf]
        %v565 = vld [vmem:[#allocation2 + $0xc0] sm:$0xf]
        %v566 = vld [vmem:[#allocation2 + $0xc4] sm:$0xf]
        %v567 = vld [vmem:[#allocation2 + $0xc8] sm:$0xf]
        %v568 = vld [vmem:[#allocation2 + $0xcc] sm:$0xf]
        %v569 = vld [vmem:[#allocation2 + $0xd0] sm:$0xf]
        %v570 = vld [vmem:[#allocation2 + $0xd4] sm:$0xf]
        %v571 = vld [vmem:[#allocation2 + $0xd8] sm:$0xf]
        %v572 = vld [vmem:[#allocation2 + $0xdc] sm:$0xf]
        %v573 = vld [vmem:[#allocation2 + $0xe0] sm:$0xf]
        %v574 = vld [vmem:[#allocation2 + $0xe4] sm:$0xf]
        %v575 = vld [vmem:[#allocation2 + $0xe8] sm:$0xf]
        %v576 = vld [vmem:[#allocation2 + $0xec] sm:$0xf]
        %v577 = vld [vmem:[#allocation2 + $0xf0] sm:$0xf]
        %v578 = vld [vmem:[#allocation2 + $0xf4] sm:$0xf]
        %v579 = vld [vmem:[#allocation2 + $0xf8] sm:$0xf]
        %v580 = vld [vmem:[#allocation2 + $0xfc] sm:$0xf]
        %v581 = vld [vmem:[#allocation2 + $0x100] sm:$0xf]
        %v582 = vld [vmem:[#allocation2 + $0x104] sm:$0xf]
        %v583 = vld [vmem:[%s2 + $0x2] sm:$0x1]
        %v584 = vrot.slane %v547, 7
        %v585 = vrot.slane %v548, 7
        %v586 = vrot.slane %v549, 7
        %v587 = vrot.slane %v550, 7
        %v588 = vsel %vm385, %v586, %v587
        %v589 = vsel %vm385, %v585, %v586
        %v590 = vsel %vm385, %v584, %v585
        %v591 = vsel %vm385, %v587, %v584
        %v592 = vmul.f32 %v249, %v591
        %v593 = vmul.f32 %v250, %v590
        %v594 = vmul.f32 %v251, %v589
        %v595 = vmul.f32 %v252, %v588
        %v596 = vpack.c.bf16 %v593, %v592
        %v597 = vpack.c.bf16 %v548, %v547
        %v598 = vpack.c.bf16 %v595, %v594
        %v599 = vpack.c.bf16 %v550, %v549
        %v600 = vlaneseq
        %v601 = vshrl.u32 %v600, 7
        %v602 = vsub.s32 0, %v601
        %v603 = vrot.slane %v583, %v602
        %v636 = vunpack.c.l.b16 %v551
        %v637 = vunpack.c.l.b16 %v552
        %v638 = vunpack.c.l.b16 %v553
        %v639 = vunpack.c.l.b16 %v554
        %v640 = vunpack.c.l.b16 %v555
        %v641 = vunpack.c.l.b16 %v556
        %v642 = vunpack.c.l.b16 %v557
        %v643 = vunpack.c.l.b16 %v558
        %v644 = vunpack.c.l.b16 %v559
        %v645 = vunpack.c.l.b16 %v560
        %v646 = vunpack.c.l.b16 %v561
        %v647 = vunpack.c.l.b16 %v562
        %v648 = vunpack.c.l.b16 %v563
        %v649 = vunpack.c.l.b16 %v564
        %v650 = vunpack.c.l.b16 %v565
        %v651 = vunpack.c.l.b16 %v566
        %v652 = vunpack.c.l.b16 %v567
        %v653 = vunpack.c.l.b16 %v568
        %v654 = vunpack.c.l.b16 %v569
        %v655 = vunpack.c.l.b16 %v570
        %v656 = vunpack.c.l.b16 %v571
        %v657 = vunpack.c.l.b16 %v572
        %v658 = vunpack.c.l.b16 %v573
        %v659 = vunpack.c.l.b16 %v574
        %v660 = vunpack.c.l.b16 %v575
        %v661 = vunpack.c.l.b16 %v576
        %v662 = vunpack.c.l.b16 %v577
        %v663 = vunpack.c.l.b16 %v578
        %v664 = vunpack.c.l.b16 %v579
        %v665 = vunpack.c.l.b16 %v580
        %v666 = vunpack.c.l.b16 %v581
        %v667 = vunpack.c.l.b16 %v582
        %v668 = vpack.c.b16 %v637, %v636
        %v669 = vpack.c.b16 %v639, %v638
        %v670 = vpack.c.b16 %v641, %v640
        %v671 = vpack.c.b16 %v643, %v642
        %v672 = vpack.c.b16 %v645, %v644
        %v673 = vpack.c.b16 %v647, %v646
        %v674 = vpack.c.b16 %v649, %v648
        %v675 = vpack.c.b16 %v651, %v650
        %v676 = vpack.c.b16 %v653, %v652
        %v677 = vpack.c.b16 %v655, %v654
        %v678 = vpack.c.b16 %v657, %v656
        %v679 = vpack.c.b16 %v659, %v658
        %v680 = vpack.c.b16 %v661, %v660
        %v681 = vpack.c.b16 %v663, %v662
        %v682 = vpack.c.b16 %v665, %v664
        %v683 = vpack.c.b16 %v667, %v666
        %700 = vmatprep.subr.bf16.mxu0 0
        %701 = vmatpush1.bf16.msra.mxu0 %v675
        %702 = vmatprep.subr.bf16.mxu0 0
        %703 = vmatpush1.bf16.msra.mxu0 %v674
        %704 = vmatprep.subr.bf16.mxu0 0
        %705 = vmatpush1.bf16.msra.mxu0 %v673
        %706 = vmatprep.subr.bf16.mxu0 0
        %707 = vmatpush1.bf16.msra.mxu0 %v672
        %708 = vmatprep.subr.bf16.mxu0 0
        %709 = vmatpush1.bf16.msra.mxu0 %v671
        %710 = vmatprep.subr.bf16.mxu0 0
        %711 = vmatpush1.bf16.msra.mxu0 %v670
        %712 = vmatprep.subr.bf16.mxu0 0
        %713 = vmatpush1.bf16.msra.mxu0 %v669
        %714 = vmatprep.subr.bf16.mxu0 0
        %715 = vmatpush1.bf16.msra.mxu0 %v668
        %716 = vmatprep.subr.bf16.mxu0 0
        %717 = vmatpush2.bf16.msra.mxu0 %v683
        %718 = vmatprep.subr.bf16.mxu0 0
        %719 = vmatpush2.bf16.msra.mxu0 %v682
        %720 = vmatprep.subr.bf16.mxu0 0
        %721 = vmatpush2.bf16.msra.mxu0 %v681
        %722 = vmatprep.subr.bf16.mxu0 0
        %723 = vmatpush2.bf16.msra.mxu0 %v680
        %724 = vmatprep.subr.bf16.mxu0 0
        %725 = vmatpush2.bf16.msra.mxu0 %v679
        %726 = vmatprep.subr.bf16.mxu0 0
        %727 = vmatpush2.bf16.msra.mxu0 %v678
        %728 = vmatprep.subr.bf16.mxu0 0
        %729 = vmatpush2.bf16.msra.mxu0 %v677
        %730 = vmatprep.subr.bf16.mxu0 0
        %731 = vmatpush2.bf16.msra.mxu0 %v676
        %732 = vmatprep.mubr.bf16.mxu0 %v597
        %733 = vmatmul.mubr.bf16.gmra.mxu0 %v596
        %v734 = vpop.f32.mrf.mxu0
        %v735 = vadd.f32 %v603, %v734
        %v736 = vpop.f32.mrf.mxu0
        %v737 = vpop.f32.mrf.mxu0
        %v738 = vadd.f32 %v603, %v737
        %v739 = vpop.f32.mrf.mxu0
        %740 = vmatprep.mubr.bf16.mxu0 %v599
        %741 = vmatmul.mubr.bf16.gmra.mxu0 %v598
        %v742 = vpop.f32.mrf.mxu0
        %v743 = vadd.f32 %v603, %v742
        %v744 = vpop.f32.mrf.mxu0
        %v745 = vpop.f32.mrf.mxu0
        %v746 = vadd.f32 %v603, %v745
        %v747 = vpop.f32.mrf.mxu0
        %748 = vdwg.mxu0
        %v749 = vmax.f32 %v735, 0.0
        %v750 = vmax.f32 %v738, 0.0
        %v751 = vmax.f32 %v743, 0.0
        %v752 = vmax.f32 %v746, 0.0
        %v753 = vld [vmem:[#allocation2 + $0x108] sm:$0xf]
        %v754 = vld [vmem:[#allocation2 + $0x10c] sm:$0xf]
        %v755 = vld [vmem:[#allocation2 + $0x110] sm:$0xf]
        %v756 = vld [vmem:[#allocation2 + $0x114] sm:$0xf]
        %v757 = vld [vmem:[#allocation2 + $0x118] sm:$0xf]
        %v758 = vld [vmem:[#allocation2 + $0x11c] sm:$0xf]
        %v759 = vld [vmem:[#allocation2 + $0x120] sm:$0xf]
        %v760 = vld [vmem:[#allocation2 + $0x124] sm:$0xf]
        %v761 = vld [vmem:[#allocation2 + $0x128] sm:$0xf]
        %v762 = vld [vmem:[#allocation2 + $0x12c] sm:$0xf]
        %v763 = vld [vmem:[#allocation2 + $0x130] sm:$0xf]
        %v764 = vld [vmem:[#allocation2 + $0x134] sm:$0xf]
        %v765 = vld [vmem:[#allocation2 + $0x138] sm:$0xf]
        %v766 = vld [vmem:[#allocation2 + $0x13c] sm:$0xf]
        %v767 = vld [vmem:[#allocation2 + $0x140] sm:$0xf]
        %v768 = vld [vmem:[#allocation2 + $0x144] sm:$0xf]
        %v769 = vld [vmem:[%s2 + $0x3] sm:$0x1]
        %v770 = vlaneseq
        %v771 = vshrl.u32 %v770, 7
        %v772 = vsub.s32 0, %v771
        %v773 = vrot.slane %v769, %v772
        %v790 = vunpack.c.l.b16 %v753
        %v791 = vunpack.c.l.b16 %v754
        %v792 = vunpack.c.l.b16 %v755
        %v793 = vunpack.c.l.b16 %v756
        %v794 = vunpack.c.l.b16 %v757
        %v795 = vunpack.c.l.b16 %v758
        %v796 = vunpack.c.l.b16 %v759
        %v797 = vunpack.c.l.b16 %v760
        %v798 = vunpack.c.l.b16 %v761
        %v799 = vunpack.c.l.b16 %v762
        %v800 = vunpack.c.l.b16 %v763
        %v801 = vunpack.c.l.b16 %v764
        %v802 = vunpack.c.l.b16 %v765
        %v803 = vunpack.c.l.b16 %v766
        %v804 = vunpack.c.l.b16 %v767
        %v805 = vunpack.c.l.b16 %v768
        %v806 = vpack.c.b16 %v791, %v790
        %v807 = vpack.c.b16 %v793, %v792
        %v808 = vpack.c.b16 %v795, %v794
        %v809 = vpack.c.b16 %v797, %v796
        %v810 = vpack.c.b16 %v799, %v798
        %v811 = vpack.c.b16 %v801, %v800
        %v812 = vpack.c.b16 %v803, %v802
        %v813 = vpack.c.b16 %v805, %v804
        %822 = vmatprep.subr.bf16.mxu0 0
        %823 = vmatpush1.bf16.msra.mxu0 %v813
        %824 = vmatprep.subr.bf16.mxu0 0
        %825 = vmatpush1.bf16.msra.mxu0 %v812
        %826 = vmatprep.subr.bf16.mxu0 0
        %827 = vmatpush1.bf16.msra.mxu0 %v811
        %828 = vmatprep.subr.bf16.mxu0 0
        %829 = vmatpush1.bf16.msra.mxu0 %v810
        %830 = vmatprep.subr.bf16.mxu0 0
        %831 = vmatpush1.bf16.msra.mxu0 %v809
        %832 = vmatprep.subr.bf16.mxu0 0
        %833 = vmatpush1.bf16.msra.mxu0 %v808
        %834 = vmatprep.subr.bf16.mxu0 0
        %835 = vmatpush1.bf16.msra.mxu0 %v807
        %836 = vmatprep.subr.bf16.mxu0 0
        %837 = vmatpush1.bf16.msra.mxu0 %v806
        %838 = vmatprep.subr.bf16.mxu0 0
        %839 = vmatpush2.bf16.msra.mxu0 0
        %840 = vmatprep.subr.bf16.mxu0 0
        %841 = vmatpush2.bf16.msra.mxu0 0
        %842 = vmatprep.subr.bf16.mxu0 0
        %843 = vmatpush2.bf16.msra.mxu0 0
        %844 = vmatprep.subr.bf16.mxu0 0
        %845 = vmatpush2.bf16.msra.mxu0 0
        %846 = vmatprep.subr.bf16.mxu0 0
        %847 = vmatpush2.bf16.msra.mxu0 0
        %848 = vmatprep.subr.bf16.mxu0 0
        %849 = vmatpush2.bf16.msra.mxu0 0
        %850 = vmatprep.subr.bf16.mxu0 0
        %851 = vmatpush2.bf16.msra.mxu0 0
        %852 = vmatprep.subr.bf16.mxu0 0
        %853 = vmatpush2.bf16.msra.mxu0 0
        %854 = vmatprep.mubr.bf16.mxu0 0
        %855 = vmatmul.mubr.bf16.gmra.mxu0 %v395
        %v856 = vpop.f32.mrf.mxu0
        %v857 = vadd.f32 %v773, %v856
        %v858 = vpop.f32.mrf.mxu0
        %v859 = vpop.f32.mrf.mxu0
        %v860 = vadd.f32 %v773, %v859
        %v861 = vpop.f32.mrf.mxu0
        %862 = vmatprep.mubr.bf16.mxu0 0
        %863 = vmatmul.mubr.bf16.gmra.mxu0 %v397
        %v864 = vpop.f32.mrf.mxu0
        %v865 = vadd.f32 %v773, %v864
        %v866 = vpop.f32.mrf.mxu0
        %v867 = vpop.f32.mrf.mxu0
        %v868 = vadd.f32 %v773, %v867
        %v869 = vpop.f32.mrf.mxu0
        %870 = vdwg.mxu0
        %v871 = vadd.f32 %v749, %v857
        %v872 = vadd.f32 %v750, %v860
        %v873 = vadd.f32 %v751, %v865
        %v874 = vadd.f32 %v752, %v868
        %v875 = vmax.f32 %v871, 0.0
        %v876 = vmax.f32 %v872, 0.0
        %v877 = vmax.f32 %v873, 0.0
        %v878 = vmax.f32 %v874, 0.0
        %v879 = vld [vmem:[#allocation2 + $0x148] sm:$0xf]
        %v880 = vld [vmem:[#allocation2 + $0x14c] sm:$0xf]
        %v881 = vld [vmem:[#allocation2 + $0x150] sm:$0xf]
        %v882 = vld [vmem:[#allocation2 + $0x154] sm:$0xf]
        %v883 = vld [vmem:[#allocation2 + $0x158] sm:$0xf]
        %v884 = vld [vmem:[#allocation2 + $0x15c] sm:$0xf]
        %v885 = vld [vmem:[#allocation2 + $0x160] sm:$0xf]
        %v886 = vld [vmem:[#allocation2 + $0x164] sm:$0xf]
        %v887 = vld [vmem:[#allocation2 + $0x168] sm:$0xf]
        %v888 = vld [vmem:[#allocation2 + $0x16c] sm:$0xf]
        %v889 = vld [vmem:[#allocation2 + $0x170] sm:$0xf]
        %v890 = vld [vmem:[#allocation2 + $0x174] sm:$0xf]
        %v891 = vld [vmem:[#allocation2 + $0x178] sm:$0xf]
        %v892 = vld [vmem:[#allocation2 + $0x17c] sm:$0xf]
        %v893 = vld [vmem:[#allocation2 + $0x180] sm:$0xf]
        %v894 = vld [vmem:[#allocation2 + $0x184] sm:$0xf]
        %v895 = vld [vmem:[#allocation2 + $0x188] sm:$0xf]
        %v896 = vld [vmem:[#allocation2 + $0x18c] sm:$0xf]
        %v897 = vld [vmem:[#allocation2 + $0x190] sm:$0xf]
        %v898 = vld [vmem:[#allocation2 + $0x194] sm:$0xf]
        %v899 = vld [vmem:[#allocation2 + $0x198] sm:$0xf]
        %v900 = vld [vmem:[#allocation2 + $0x19c] sm:$0xf]
        %v901 = vld [vmem:[#allocation2 + $0x1a0] sm:$0xf]
        %v902 = vld [vmem:[#allocation2 + $0x1a4] sm:$0xf]
        %v903 = vld [vmem:[#allocation2 + $0x1a8] sm:$0xf]
        %v904 = vld [vmem:[#allocation2 + $0x1ac] sm:$0xf]
        %v905 = vld [vmem:[#allocation2 + $0x1b0] sm:$0xf]
        %v906 = vld [vmem:[#allocation2 + $0x1b4] sm:$0xf]
        %v907 = vld [vmem:[#allocation2 + $0x1b8] sm:$0xf]
        %v908 = vld [vmem:[#allocation2 + $0x1bc] sm:$0xf]
        %v909 = vld [vmem:[#allocation2 + $0x1c0] sm:$0xf]
        %v910 = vld [vmem:[#allocation2 + $0x1c4] sm:$0xf]
        %v911 = vld [vmem:[%s2 + $0x4] sm:$0x1]
        %v912 = vrot.slane %v875, 6
        %v913 = vrot.slane %v876, 6
        %v914 = vrot.slane %v877, 6
        %v915 = vrot.slane %v878, 6
        %vm916 = vcmp.lt.s32.totalorder %v189, 2
        %v917 = vsel %vm916, %v914, %v915
        %v918 = vsel %vm916, %v913, %v914
        %v919 = vsel %vm916, %v912, %v913
        %v920 = vsel %vm916, %v915, %v912
        %v921 = vmul.f32 %v261, %v920
        %v922 = vmul.f32 %v262, %v919
        %v923 = vmul.f32 %v263, %v918
        %v924 = vmul.f32 %v264, %v917
        %v925 = vpack.c.bf16 %v922, %v921
        %v926 = vpack.c.bf16 %v876, %v875
        %v927 = vpack.c.bf16 %v924, %v923
        %v928 = vpack.c.bf16 %v878, %v877
        %v929 = vlaneseq
        %v930 = vshrl.u32 %v929, 7
        %v931 = vsub.s32 0, %v930
        %v932 = vrot.slane %v911, %v931
        %v965 = vunpack.c.l.b16 %v879
        %v966 = vunpack.c.l.b16 %v880
        %v967 = vunpack.c.l.b16 %v881
        %v968 = vunpack.c.l.b16 %v882
        %v969 = vunpack.c.l.b16 %v883
        %v970 = vunpack.c.l.b16 %v884
        %v971 = vunpack.c.l.b16 %v885
        %v972 = vunpack.c.l.b16 %v886
        %v973 = vunpack.c.l.b16 %v887
        %v974 = vunpack.c.l.b16 %v888
        %v975 = vunpack.c.l.b16 %v889
        %v976 = vunpack.c.l.b16 %v890
        %v977 = vunpack.c.l.b16 %v891
        %v978 = vunpack.c.l.b16 %v892
        %v979 = vunpack.c.l.b16 %v893
        %v980 = vunpack.c.l.b16 %v894
        %v981 = vunpack.c.l.b16 %v895
        %v982 = vunpack.c.l.b16 %v896
        %v983 = vunpack.c.l.b16 %v897
        %v984 = vunpack.c.l.b16 %v898
        %v985 = vunpack.c.l.b16 %v899
        %v986 = vunpack.c.l.b16 %v900
        %v987 = vunpack.c.l.b16 %v901
        %v988 = vunpack.c.l.b16 %v902
        %v989 = vunpack.c.l.b16 %v903
        %v990 = vunpack.c.l.b16 %v904
        %v991 = vunpack.c.l.b16 %v905
        %v992 = vunpack.c.l.b16 %v906
        %v993 = vunpack.c.l.b16 %v907
        %v994 = vunpack.c.l.b16 %v908
        %v995 = vunpack.c.l.b16 %v909
        %v996 = vunpack.c.l.b16 %v910
        %v997 = vpack.c.b16 %v966, %v965
        %v998 = vpack.c.b16 %v968, %v967
        %v999 = vpack.c.b16 %v970, %v969
        %v1000 = vpack.c.b16 %v972, %v971
        %v1001 = vpack.c.b16 %v974, %v973
        %v1002 = vpack.c.b16 %v976, %v975
        %v1003 = vpack.c.b16 %v978, %v977
        %v1004 = vpack.c.b16 %v980, %v979
        %v1005 = vpack.c.b16 %v982, %v981
        %v1006 = vpack.c.b16 %v984, %v983
        %v1007 = vpack.c.b16 %v986, %v985
        %v1008 = vpack.c.b16 %v988, %v987
        %v1009 = vpack.c.b16 %v990, %v989
        %v1010 = vpack.c.b16 %v992, %v991
        %v1011 = vpack.c.b16 %v994, %v993
        %v1012 = vpack.c.b16 %v996, %v995
        %1029 = vmatprep.subr.bf16.mxu0 0
        %1030 = vmatpush1.bf16.msra.mxu0 %v1004
        %1031 = vmatprep.subr.bf16.mxu0 0
        %1032 = vmatpush1.bf16.msra.mxu0 %v1003
        %1033 = vmatprep.subr.bf16.mxu0 0
        %1034 = vmatpush1.bf16.msra.mxu0 %v1002
        %1035 = vmatprep.subr.bf16.mxu0 0
        %1036 = vmatpush1.bf16.msra.mxu0 %v1001
        %1037 = vmatprep.subr.bf16.mxu0 0
        %1038 = vmatpush1.bf16.msra.mxu0 %v1000
        %1039 = vmatprep.subr.bf16.mxu0 0
        %1040 = vmatpush1.bf16.msra.mxu0 %v999
        %1041 = vmatprep.subr.bf16.mxu0 0
        %1042 = vmatpush1.bf16.msra.mxu0 %v998
        %1043 = vmatprep.subr.bf16.mxu0 0
        %1044 = vmatpush1.bf16.msra.mxu0 %v997
        %1045 = vmatprep.subr.bf16.mxu0 0
        %1046 = vmatpush2.bf16.msra.mxu0 %v1012
        %1047 = vmatprep.subr.bf16.mxu0 0
        %1048 = vmatpush2.bf16.msra.mxu0 %v1011
        %1049 = vmatprep.subr.bf16.mxu0 0
        %1050 = vmatpush2.bf16.msra.mxu0 %v1010
        %1051 = vmatprep.subr.bf16.mxu0 0
        %1052 = vmatpush2.bf16.msra.mxu0 %v1009
        %1053 = vmatprep.subr.bf16.mxu0 0
        %1054 = vmatpush2.bf16.msra.mxu0 %v1008
        %1055 = vmatprep.subr.bf16.mxu0 0
        %1056 = vmatpush2.bf16.msra.mxu0 %v1007
        %1057 = vmatprep.subr.bf16.mxu0 0
        %1058 = vmatpush2.bf16.msra.mxu0 %v1006
        %1059 = vmatprep.subr.bf16.mxu0 0
        %1060 = vmatpush2.bf16.msra.mxu0 %v1005
        %1061 = vmatprep.mubr.bf16.mxu0 %v926
        %1062 = vmatmul.mubr.bf16.gmra.mxu0 %v925
        %v1063 = vpop.f32.mrf.mxu0
        %v1064 = vadd.f32 %v932, %v1063
        %v1065 = vpop.f32.mrf.mxu0
        %v1066 = vpop.f32.mrf.mxu0
        %v1067 = vadd.f32 %v932, %v1066
        %v1068 = vpop.f32.mrf.mxu0
        %1069 = vmatprep.mubr.bf16.mxu0 %v928
        %1070 = vmatmul.mubr.bf16.gmra.mxu0 %v927
        %v1071 = vpop.f32.mrf.mxu0
        %v1072 = vadd.f32 %v932, %v1071
        %v1073 = vpop.f32.mrf.mxu0
        %v1074 = vpop.f32.mrf.mxu0
        %v1075 = vadd.f32 %v932, %v1074
        %v1076 = vpop.f32.mrf.mxu0
        %1077 = vdwg.mxu0
        %v1078 = vmax.f32 %v1064, 0.0
        %v1079 = vmax.f32 %v1067, 0.0
        %v1080 = vmax.f32 %v1072, 0.0
        %v1081 = vmax.f32 %v1075, 0.0
        %v1082 = vld [vmem:[#allocation2 + $0x1c8] sm:$0xf]
        %v1083 = vld [vmem:[#allocation2 + $0x1cc] sm:$0xf]
        %v1084 = vld [vmem:[#allocation2 + $0x1d0] sm:$0xf]
        %v1085 = vld [vmem:[#allocation2 + $0x1d4] sm:$0xf]
        %v1086 = vld [vmem:[#allocation2 + $0x1d8] sm:$0xf]
        %v1087 = vld [vmem:[#allocation2 + $0x1dc] sm:$0xf]
        %v1088 = vld [vmem:[#allocation2 + $0x1e0] sm:$0xf]
        %v1089 = vld [vmem:[#allocation2 + $0x1e4] sm:$0xf]
        %v1090 = vld [vmem:[#allocation2 + $0x1e8] sm:$0xf]
        %v1091 = vld [vmem:[#allocation2 + $0x1ec] sm:$0xf]
        %v1092 = vld [vmem:[#allocation2 + $0x1f0] sm:$0xf]
        %v1093 = vld [vmem:[#allocation2 + $0x1f4] sm:$0xf]
        %v1094 = vld [vmem:[#allocation2 + $0x1f8] sm:$0xf]
        %v1095 = vld [vmem:[#allocation2 + $0x1fc] sm:$0xf]
        %v1096 = vld [vmem:[#allocation2 + $0x200] sm:$0xf]
        %v1097 = vld [vmem:[#allocation2 + $0x204] sm:$0xf]
        %v1098 = vld [vmem:[#allocation2 + $0x208] sm:$0xf]
        %v1099 = vld [vmem:[#allocation2 + $0x20c] sm:$0xf]
        %v1100 = vld [vmem:[#allocation2 + $0x210] sm:$0xf]
        %v1101 = vld [vmem:[#allocation2 + $0x214] sm:$0xf]
        %v1102 = vld [vmem:[#allocation2 + $0x218] sm:$0xf]
        %v1103 = vld [vmem:[#allocation2 + $0x21c] sm:$0xf]
        %v1104 = vld [vmem:[#allocation2 + $0x220] sm:$0xf]
        %v1105 = vld [vmem:[#allocation2 + $0x224] sm:$0xf]
        %v1106 = vld [vmem:[#allocation2 + $0x228] sm:$0xf]
        %v1107 = vld [vmem:[#allocation2 + $0x22c] sm:$0xf]
        %v1108 = vld [vmem:[#allocation2 + $0x230] sm:$0xf]
        %v1109 = vld [vmem:[#allocation2 + $0x234] sm:$0xf]
        %v1110 = vld [vmem:[#allocation2 + $0x238] sm:$0xf]
        %v1111 = vld [vmem:[#allocation2 + $0x23c] sm:$0xf]
        %v1112 = vld [vmem:[#allocation2 + $0x240] sm:$0xf]
        %v1113 = vld [vmem:[#allocation2 + $0x244] sm:$0xf]
        %v1114 = vld [vmem:[%s2 + $0x5] sm:$0x1]
        %v1115 = vrot.slane %v1078, 6
        %v1116 = vrot.slane %v1079, 6
        %v1117 = vrot.slane %v1080, 6
        %v1118 = vrot.slane %v1081, 6
        %v1119 = vsel %vm916, %v1117, %v1118
        %v1120 = vsel %vm916, %v1116, %v1117
        %v1121 = vsel %vm916, %v1115, %v1116
        %v1122 = vsel %vm916, %v1118, %v1115
        %v1123 = vmul.f32 %v261, %v1122
        %v1124 = vmul.f32 %v262, %v1121
        %v1125 = vmul.f32 %v263, %v1120
        %v1126 = vmul.f32 %v264, %v1119
        %v1127 = vpack.c.bf16 %v1124, %v1123
        %v1128 = vpack.c.bf16 %v1079, %v1078
        %v1129 = vpack.c.bf16 %v1126, %v1125
        %v1130 = vpack.c.bf16 %v1081, %v1080
        %v1131 = vlaneseq
        %v1132 = vshrl.u32 %v1131, 7
        %v1133 = vsub.s32 0, %v1132
        %v1134 = vrot.slane %v1114, %v1133
        %v1167 = vunpack.c.l.b16 %v1082
        %v1168 = vunpack.c.l.b16 %v1083
        %v1169 = vunpack.c.l.b16 %v1084
        %v1170 = vunpack.c.l.b16 %v1085
        %v1171 = vunpack.c.l.b16 %v1086
        %v1172 = vunpack.c.l.b16 %v1087
        %v1173 = vunpack.c.l.b16 %v1088
        %v1174 = vunpack.c.l.b16 %v1089
        %v1175 = vunpack.c.l.b16 %v1090
        %v1176 = vunpack.c.l.b16 %v1091
        %v1177 = vunpack.c.l.b16 %v1092
        %v1178 = vunpack.c.l.b16 %v1093
        %v1179 = vunpack.c.l.b16 %v1094
        %v1180 = vunpack.c.l.b16 %v1095
        %v1181 = vunpack.c.l.b16 %v1096
        %v1182 = vunpack.c.l.b16 %v1097
        %v1183 = vunpack.c.l.b16 %v1098
        %v1184 = vunpack.c.l.b16 %v1099
        %v1185 = vunpack.c.l.b16 %v1100
        %v1186 = vunpack.c.l.b16 %v1101
        %v1187 = vunpack.c.l.b16 %v1102
        %v1188 = vunpack.c.l.b16 %v1103
        %v1189 = vunpack.c.l.b16 %v1104
        %v1190 = vunpack.c.l.b16 %v1105
        %v1191 = vunpack.c.l.b16 %v1106
        %v1192 = vunpack.c.l.b16 %v1107
        %v1193 = vunpack.c.l.b16 %v1108
        %v1194 = vunpack.c.l.b16 %v1109
        %v1195 = vunpack.c.l.b16 %v1110
        %v1196 = vunpack.c.l.b16 %v1111
        %v1197 = vunpack.c.l.b16 %v1112
        %v1198 = vunpack.c.l.b16 %v1113
        %v1199 = vpack.c.b16 %v1168, %v1167
        %v1200 = vpack.c.b16 %v1170, %v1169
        %v1201 = vpack.c.b16 %v1172, %v1171
        %v1202 = vpack.c.b16 %v1174, %v1173
        %v1203 = vpack.c.b16 %v1176, %v1175
        %v1204 = vpack.c.b16 %v1178, %v1177
        %v1205 = vpack.c.b16 %v1180, %v1179
        %v1206 = vpack.c.b16 %v1182, %v1181
        %v1207 = vpack.c.b16 %v1184, %v1183
        %v1208 = vpack.c.b16 %v1186, %v1185
        %v1209 = vpack.c.b16 %v1188, %v1187
        %v1210 = vpack.c.b16 %v1190, %v1189
        %v1211 = vpack.c.b16 %v1192, %v1191
        %v1212 = vpack.c.b16 %v1194, %v1193
        %v1213 = vpack.c.b16 %v1196, %v1195
        %v1214 = vpack.c.b16 %v1198, %v1197
        %1231 = vmatprep.subr.bf16.mxu0 0
        %1232 = vmatpush1.bf16.msra.mxu0 %v1206
        %1233 = vmatprep.subr.bf16.mxu0 0
        %1234 = vmatpush1.bf16.msra.mxu0 %v1205
        %1235 = vmatprep.subr.bf16.mxu0 0
        %1236 = vmatpush1.bf16.msra.mxu0 %v1204
        %1237 = vmatprep.subr.bf16.mxu0 0
        %1238 = vmatpush1.bf16.msra.mxu0 %v1203
        %1239 = vmatprep.subr.bf16.mxu0 0
        %1240 = vmatpush1.bf16.msra.mxu0 %v1202
        %1241 = vmatprep.subr.bf16.mxu0 0
        %1242 = vmatpush1.bf16.msra.mxu0 %v1201
        %1243 = vmatprep.subr.bf16.mxu0 0
        %1244 = vmatpush1.bf16.msra.mxu0 %v1200
        %1245 = vmatprep.subr.bf16.mxu0 0
        %1246 = vmatpush1.bf16.msra.mxu0 %v1199
        %1247 = vmatprep.subr.bf16.mxu0 0
        %1248 = vmatpush2.bf16.msra.mxu0 %v1214
        %1249 = vmatprep.subr.bf16.mxu0 0
        %1250 = vmatpush2.bf16.msra.mxu0 %v1213
        %1251 = vmatprep.subr.bf16.mxu0 0
        %1252 = vmatpush2.bf16.msra.mxu0 %v1212
        %1253 = vmatprep.subr.bf16.mxu0 0
        %1254 = vmatpush2.bf16.msra.mxu0 %v1211
        %1255 = vmatprep.subr.bf16.mxu0 0
        %1256 = vmatpush2.bf16.msra.mxu0 %v1210
        %1257 = vmatprep.subr.bf16.mxu0 0
        %1258 = vmatpush2.bf16.msra.mxu0 %v1209
        %1259 = vmatprep.subr.bf16.mxu0 0
        %1260 = vmatpush2.bf16.msra.mxu0 %v1208
        %1261 = vmatprep.subr.bf16.mxu0 0
        %1262 = vmatpush2.bf16.msra.mxu0 %v1207
        %1263 = vmatprep.mubr.bf16.mxu0 %v1128
        %1264 = vmatmul.mubr.bf16.gmra.mxu0 %v1127
        %v1265 = vpop.f32.mrf.mxu0
        %v1266 = vadd.f32 %v1134, %v1265
        %v1267 = vpop.f32.mrf.mxu0
        %v1268 = vpop.f32.mrf.mxu0
        %v1269 = vadd.f32 %v1134, %v1268
        %v1270 = vpop.f32.mrf.mxu0
        %1271 = vmatprep.mubr.bf16.mxu0 %v1130
        %1272 = vmatmul.mubr.bf16.gmra.mxu0 %v1129
        %v1273 = vpop.f32.mrf.mxu0
        %v1274 = vadd.f32 %v1134, %v1273
        %v1275 = vpop.f32.mrf.mxu0
        %v1276 = vpop.f32.mrf.mxu0
        %v1277 = vadd.f32 %v1134, %v1276
        %v1278 = vpop.f32.mrf.mxu0
        %1279 = vdwg.mxu0
        %v1280 = vmax.f32 %v1266, 0.0
        %v1281 = vmax.f32 %v1269, 0.0
        %v1282 = vmax.f32 %v1274, 0.0
        %v1283 = vmax.f32 %v1277, 0.0
        %v1284 = vadd.f32 %v1280, %v875
        %v1285 = vadd.f32 %v1281, %v876
        %v1286 = vadd.f32 %v1282, %v877
        %v1287 = vadd.f32 %v1283, %v878
        %v1288 = vmax.f32 %v1284, 0.0
        %v1289 = vmax.f32 %v1285, 0.0
        %v1290 = vmax.f32 %v1286, 0.0
        %v1291 = vmax.f32 %v1287, 0.0
        %v1292 = vld [vmem:[#allocation2 + $0x248] sm:$0xf]
        %v1293 = vld [vmem:[#allocation2 + $0x24c] sm:$0xf]
        %v1294 = vld [vmem:[#allocation2 + $0x250] sm:$0xf]
        %v1295 = vld [vmem:[#allocation2 + $0x254] sm:$0xf]
        %v1296 = vld [vmem:[#allocation2 + $0x258] sm:$0xf]
        %v1297 = vld [vmem:[#allocation2 + $0x25c] sm:$0xf]
        %v1298 = vld [vmem:[#allocation2 + $0x260] sm:$0xf]
        %v1299 = vld [vmem:[#allocation2 + $0x264] sm:$0xf]
        %v1300 = vld [vmem:[#allocation2 + $0x268] sm:$0xf]
        %v1301 = vld [vmem:[#allocation2 + $0x26c] sm:$0xf]
        %v1302 = vld [vmem:[#allocation2 + $0x270] sm:$0xf]
        %v1303 = vld [vmem:[#allocation2 + $0x274] sm:$0xf]
        %v1304 = vld [vmem:[#allocation2 + $0x278] sm:$0xf]
        %v1305 = vld [vmem:[#allocation2 + $0x27c] sm:$0xf]
        %v1306 = vld [vmem:[#allocation2 + $0x280] sm:$0xf]
        %v1307 = vld [vmem:[#allocation2 + $0x284] sm:$0xf]
        %v1308 = vpack.c.bf16 %v1289, %v1288
        %v1309 = vpack.c.bf16 %v1291, %v1290
        %v1310 = vld [vmem:[%s2 + $0x6] sm:$0x1]
        %v1311 = vlaneseq
        %v1312 = vshrl.u32 %v1311, 7
        %v1313 = vsub.s32 0, %v1312
        %v1314 = vrot.slane %v1310, %v1313
        %v1331 = vunpack.c.l.b16 %v1292
        %v1332 = vunpack.c.l.b16 %v1293
        %v1333 = vunpack.c.l.b16 %v1294
        %v1334 = vunpack.c.l.b16 %v1295
        %v1335 = vunpack.c.l.b16 %v1296
        %v1336 = vunpack.c.l.b16 %v1297
        %v1337 = vunpack.c.l.b16 %v1298
        %v1338 = vunpack.c.l.b16 %v1299
        %v1339 = vunpack.c.l.b16 %v1300
        %v1340 = vunpack.c.l.b16 %v1301
        %v1341 = vunpack.c.l.b16 %v1302
        %v1342 = vunpack.c.l.b16 %v1303
        %v1343 = vunpack.c.l.b16 %v1304
        %v1344 = vunpack.c.l.b16 %v1305
        %v1345 = vunpack.c.l.b16 %v1306
        %v1346 = vunpack.c.l.b16 %v1307
        %v1347 = vpack.c.b16 %v1332, %v1331
        %v1348 = vpack.c.b16 %v1334, %v1333
        %v1349 = vpack.c.b16 %v1336, %v1335
        %v1350 = vpack.c.b16 %v1338, %v1337
        %v1351 = vpack.c.b16 %v1340, %v1339
        %v1352 = vpack.c.b16 %v1342, %v1341
        %v1353 = vpack.c.b16 %v1344, %v1343
        %v1354 = vpack.c.b16 %v1346, %v1345
        %1363 = vmatprep.subr.bf16.mxu0 0
        %1364 = vmatpush1.bf16.msra.mxu0 %v1354
        %1365 = vmatprep.subr.bf16.mxu0 0
        %1366 = vmatpush1.bf16.msra.mxu0 %v1353
        %1367 = vmatprep.subr.bf16.mxu0 0
        %1368 = vmatpush1.bf16.msra.mxu0 %v1352
        %1369 = vmatprep.subr.bf16.mxu0 0
        %1370 = vmatpush1.bf16.msra.mxu0 %v1351
        %1371 = vmatprep.subr.bf16.mxu0 0
        %1372 = vmatpush1.bf16.msra.mxu0 %v1350
        %1373 = vmatprep.subr.bf16.mxu0 0
        %1374 = vmatpush1.bf16.msra.mxu0 %v1349
        %1375 = vmatprep.subr.bf16.mxu0 0
        %1376 = vmatpush1.bf16.msra.mxu0 %v1348
        %1377 = vmatprep.subr.bf16.mxu0 0
        %1378 = vmatpush1.bf16.msra.mxu0 %v1347
        %1379 = vmatprep.subr.bf16.mxu0 0
        %1380 = vmatpush2.bf16.msra.mxu0 0
        %1381 = vmatprep.subr.bf16.mxu0 0
        %1382 = vmatpush2.bf16.msra.mxu0 0
        %1383 = vmatprep.subr.bf16.mxu0 0
        %1384 = vmatpush2.bf16.msra.mxu0 0
        %1385 = vmatprep.subr.bf16.mxu0 0
        %1386 = vmatpush2.bf16.msra.mxu0 0
        %1387 = vmatprep.subr.bf16.mxu0 0
        %1388 = vmatpush2.bf16.msra.mxu0 0
        %1389 = vmatprep.subr.bf16.mxu0 0
        %1390 = vmatpush2.bf16.msra.mxu0 0
        %1391 = vmatprep.subr.bf16.mxu0 0
        %1392 = vmatpush2.bf16.msra.mxu0 0
        %1393 = vmatprep.subr.bf16.mxu0 0
        %1394 = vmatpush2.bf16.msra.mxu0 0
        %1395 = vmatprep.mubr.bf16.mxu0 0
        %1396 = vmatmul.mubr.bf16.gmra.mxu0 %v1308
        %v1397 = vpop.f32.mrf.mxu0
        %v1398 = vadd.f32 %v1314, %v1397
        %v1399 = vpop.f32.mrf.mxu0
        %v1400 = vpop.f32.mrf.mxu0
        %v1401 = vadd.f32 %v1314, %v1400
        %v1402 = vpop.f32.mrf.mxu0
        %1403 = vmatprep.mubr.bf16.mxu0 0
        %1404 = vmatmul.mubr.bf16.gmra.mxu0 %v1309
        %v1405 = vpop.f32.mrf.mxu0
        %v1406 = vadd.f32 %v1314, %v1405
        %v1407 = vpop.f32.mrf.mxu0
        %v1408 = vpop.f32.mrf.mxu0
        %v1409 = vadd.f32 %v1314, %v1408
        %v1410 = vpop.f32.mrf.mxu0
        %1411 = vdwg.mxu0
        %1412 = vst [vmem:[%s179] sm:$0xff] %v1398
        %1413 = vst [vmem:[%s179 + $0x8] sm:$0xff] %v1401
        %1414 = vst [vmem:[%s179 + $0x10] sm:$0xff] %v1406
        %1415 = vst [vmem:[%s179 + $0x18] sm:$0xff] %v1409
        %s1416 = sand.u32 %s94, 1
        %s1417 = scalar_lea.sflag [#allocation4], %s1416
        %s1418 = sand.u32 %s94, 1
        %s1419 = smul.addr %s1418, 32
        %s1420 = scalar_lea.vmem [#allocation5], %s1419
        // Predicated region
        $region37: #{tpu_custom_call.1} parent=31 // pred_check
          %p1421 = pneg %p104
        $region38: #{tpu_custom_call.1} parent=31 // pred_check_branch
          %1423 = sbr.rel (%p1421) target = $region40
        $region39: #{tpu_custom_call.1} parent=31 // pred_region
          %s1424 = smul.u32 4, %s18
          %s1426 = ssub.s32 512, 512
          %1427 = vsyncadd %s1417, %s1426
          %s1428 = smul.addr %s1424, 128
          %s1429 = scalar_lea.hbm %s3, %s1428
          %s1430 = sshll.u32 %s1420, 4
          %s1431 = int_to_ptr.vmem [resolvable:$true] %s1430
          %1436 = dma.vmem_to_hbm [thread:$0]  %s1431, 512, %s1429, %s1417, 128, 128, 8
        $region40: #{tpu_custom_call.1} parent=31 // pred_fallthru
          _
      $region32: #{tpu_custom_call.1} parent=5 // pred_fallthru
        _
      %p1437 = scmp.le.s32.totalorder 2, %s13
      // Predicated region
      $region41: #{tpu_custom_call.1} parent=5 // pred_check
        %p1438 = pneg %p1437
      $region42: #{tpu_custom_call.1} parent=5 // pred_check_branch
        %1440 = sbr.rel (%p1438) target = $region44
      $region43: #{tpu_custom_call.1} parent=5 // pred_region
        %s1441 = ssub.s32 %s13, 2
        // Predicated region
        $region45: #{tpu_custom_call.1} parent=43 // pred_check
          %p1442 = pneg %p110
        $region46: #{tpu_custom_call.1} parent=43 // pred_check_branch
          %1444 = sbr.rel (%p1442) target = $region48
        $region47: #{tpu_custom_call.1} parent=43 // pred_region
          %s1445 = sand.u32 %s95, 1
          %s1446 = scalar_lea.sflag [#allocation4], %s1445
          %s1447 = sand.u32 %s95, 1
          %s1448 = smul.addr %s1447, 32
          %s1449 = scalar_lea.vmem [#allocation5], %s1448
          %1450 = dma.done %s1446, 512
        $region48: #{tpu_custom_call.1} parent=43 // pred_fallthru
          _
      $region44: #{tpu_custom_call.1} parent=5 // pred_fallthru
        _
    $region6: #{tpu_custom_call.1} parent=1 // loop_footer
      %s17 = sadd.s32 1, %s13
    $region7: #{tpu_custom_call.1} parent=1 // loop_footer_branch
      %12 = sbr.rel target = $region3
    $region8: #{tpu_custom_call.1} parent=1 // loop_exit
      _
    %1451 = vsyncpa [#allocation3], 1
    %s1452 = scalar_lea.sflag [#allocation3], 1
    %1453 = vsyncpa %s1452, 1
    %1454 = vsyncpa [#allocation4], 1
    %s1455 = scalar_lea.sflag [#allocation4], 1
    %1456 = vsyncpa %s1455, 1

</llo_original>
